<compile_context>
chip_gen: v5e
topology: v5e:2x2
jax: 0.10.0
libtpu: 0.0.40
codegen_flags: <defaults>
</compile_context>

<pallas_src>
import functools

import jax
import jax.numpy as jnp
from jax import lax
from jax.experimental import pallas as pl
from jax.experimental.pallas import tpu as pltpu

LANE = 128


def _round_up(v, m):
    return ((v + m - 1) // m) * m


# ----------------------------- Pallas kernel -------------------------------


def _pdggnn_fused_kernel(edge_ref, x_ref, w0_ref, b0_ref, cw_ref, cb_ref,
                         wk_ref, w1_ref, b1_ref, o_ref, *,
                         num_layers, K, HP, N, E):
    """Fused PDGGNN forward for one graph of the batch.

    edge (1,2,E) i32, x (1,N,D) f32, w0 (D,HP) bf16, b0 (1,HP) f32,
    cw (L,HP,K) bf16, cb (L,1,K) f32, wk (L,HP,K*HP) bf16 (expert k in the
    128-aligned column block [k*HP,(k+1)*HP)), w1 (HP,CPAD) bf16,
    b1 (1,CPAD) f32  ->  o (1,N,CPAD) f32.
    """
    # ---- dense adjacency from the edge list (to_dense_adj equivalent) ----
    ei = edge_ref[0]                                        # (2, E) int32
    src = ei[0:1, :]                                        # (1, E)
    dst = ei[1:2, :]                                        # (1, E)
    node_ids = lax.broadcasted_iota(jnp.int32, (N, E), 0)   # node id per row
    src_oh = (node_ids == src).astype(jnp.float32)          # (N, E)
    dst_oh = (node_ids == dst).astype(jnp.float32)          # (N, E)
    # adj[i, j] = #edges e with src_e == i and dst_e == j (duplicates sum)
    adj = lax.dot_general(src_oh, dst_oh, (((1,), (1,)), ((), ())),
                          preferred_element_type=jnp.float32)   # (N, N)
    adj = adj.astype(jnp.bfloat16)

    # ---- fc0 + ReLU (dropout is identity in eval mode) ----
    x = x_ref[0].astype(jnp.bfloat16)                       # (N, D)
    h = jnp.dot(x, w0_ref[...],
                preferred_element_type=jnp.float32) + b0_ref[...]
    h = jnp.maximum(h, 0.0)                                 # (N, HP) f32; lanes >= H are 0

    for l in range(num_layers):                             # static unroll (L small)
        h_bf = h.astype(jnp.bfloat16)

        # context encoder ('node'): z = softmax(h @ Wc + bc)  (f32 softmax)
        logit = jnp.dot(h_bf, cw_ref[l],
                        preferred_element_type=jnp.float32) + cb_ref[l]
        logit = logit - jnp.max(logit, axis=-1, keepdims=True)
        ez = jnp.exp(logit)
        z = ez * pl.reciprocal(jnp.sum(ez, axis=-1, keepdims=True),
                               approx=False)

        # neighbor aggregation: hi = adj @ h   (MXU, bf16 in / f32 acc)
        hi = jnp.dot(adj, h_bf, preferred_element_type=jnp.float32)

        # all K expert transforms in ONE lane-dense matmul: (N, K*HP)
        y = jnp.dot(hi.astype(jnp.bfloat16), wk_ref[l],
                    preferred_element_type=jnp.float32)

        # gated mixture over experts (VPU), 128-aligned slices, residual, ReLU
        acc = z[:, 0:1] * y[:, 0:HP]
        for k in range(1, K):
            acc = acc + z[:, k:k + 1] * y[:, k * HP:(k + 1) * HP]
        h = jnp.maximum(acc + h, 0.0)

    # ---- fc1 (lane-dense padded output) ----
    out = jnp.dot(h.astype(jnp.bfloat16), w1_ref[...],
                  preferred_element_type=jnp.float32) + b1_ref[...]
    o_ref[0] = out.astype(o_ref.dtype)


# --------------------------- parameter packing ------------------------------


def prepare_params(params, num_layers):
    """One-time repacking of PDGGNN parameters into kernel layout.

    Done OFF the per-call forward path: bf16 casts, 128-lane padding of the
    hidden/output widths, and per-expert weight blocks placed at 128-aligned
    column offsets.  Padded rows/cols are zero so the math is unchanged.
    """
    d, H = params["fc0_w"].shape
    K = params["ctx_w"][0].shape[1]
    C = params["fc1_w"].shape[1]
    HP = _round_up(H, LANE)
    CPAD = _round_up(C, LANE)

    w0 = jnp.zeros((d, HP), jnp.float32).at[:, :H].set(params["fc0_w"])
    b0 = jnp.zeros((1, HP), jnp.float32).at[0, :H].set(params["fc0_b"])

    cw = jnp.zeros((num_layers, HP, K), jnp.float32)
    cb = jnp.zeros((num_layers, 1, K), jnp.float32)
    wk = jnp.zeros((num_layers, HP, K * HP), jnp.float32)
    for l in range(num_layers):
        cw = cw.at[l, :H, :].set(params["ctx_w"][l])
        cb = cb.at[l, 0, :].set(params["ctx_b"][l])
        for k in range(K):
            wk = wk.at[l, :H, k * HP:k * HP + H].set(params["conv_w"][l][k])

    w1 = jnp.zeros((HP, CPAD), jnp.float32).at[:H, :C].set(params["fc1_w"])
    b1 = jnp.zeros((1, CPAD), jnp.float32).at[0, :C].set(params["fc1_b"])

    return {
        "w0": w0.astype(jnp.bfloat16), "b0": b0,
        "cw": cw.astype(jnp.bfloat16), "cb": cb,
        "wk": wk.astype(jnp.bfloat16),
        "w1": w1.astype(jnp.bfloat16), "b1": b1,
    }


# ------------------------------ forward -------------------------------------


@functools.partial(jax.jit, static_argnames=("out_channels",))
def pdggnn_forward(packed, x, edge_index, out_channels):
    """Batched PDGGNN forward (eval mode).

    x: (B, N, D) f32, edge_index: (B, 2, E) int32 (per-graph edge lists;
    duplicate edges sum as in to_dense_adj).  Returns (B, N, out_channels).
    """
    B, N, D = x.shape
    E = edge_index.shape[-1]
    num_layers, HP, K = packed["cw"].shape
    CPAD = packed["w1"].shape[1]

    edge_index = edge_index.astype(jnp.int32)

    kernel = functools.partial(_pdggnn_fused_kernel,
                               num_layers=num_layers, K=K, HP=HP, N=N, E=E)

    out_pad = pl.pallas_call(
        kernel,
        out_shape=jax.ShapeDtypeStruct((B, N, CPAD), jnp.float32),
        grid=(B,),
        in_specs=[
            pl.BlockSpec((1, 2, E), lambda b: (b, 0, 0)),                 # edges
            pl.BlockSpec((1, N, D), lambda b: (b, 0, 0)),                 # x
            pl.BlockSpec((D, HP), lambda b: (0, 0)),                      # fc0 w
            pl.BlockSpec((1, HP), lambda b: (0, 0)),                      # fc0 b
            pl.BlockSpec((num_layers, HP, K), lambda b: (0, 0, 0)),       # ctx w
            pl.BlockSpec((num_layers, 1, K), lambda b: (0, 0, 0)),        # ctx b
            pl.BlockSpec((num_layers, HP, K * HP), lambda b: (0, 0, 0)),  # experts
            pl.BlockSpec((HP, CPAD), lambda b: (0, 0)),                   # fc1 w
            pl.BlockSpec((1, CPAD), lambda b: (0, 0)),                    # fc1 b
        ],
        out_specs=pl.BlockSpec((1, N, CPAD), lambda b: (b, 0, 0)),
        compiler_params=pltpu.CompilerParams(
            dimension_semantics=("parallel",)),                # v7x: 2 TCs split B
    )(edge_index, x, packed["w0"], packed["b0"], packed["cw"], packed["cb"],
      packed["wk"], packed["w1"], packed["b1"])

    return out_pad[:, :, :out_channels]


# ------------------------------- params ------------------------------------


def init_params(key, d, hidden, c, K, num_layers):
    """Deterministic synthetic init, mirroring the module's parameter shapes."""
    ks = jax.random.split(key, 4 + 3 * num_layers)
    stdv_h = 1.0 / jnp.sqrt(hidden)
    stdv_c = 1.0 / jnp.sqrt(c)
    stdv_k = 1.0 / jnp.sqrt(K)
    params = {
        "fc0_w": jax.random.uniform(ks[0], (d, hidden), jnp.float32, -stdv_h, stdv_h),
        "fc0_b": jax.random.uniform(ks[1], (hidden,), jnp.float32, -stdv_h, stdv_h),
        "fc1_w": jax.random.uniform(ks[2], (hidden, c), jnp.float32, -stdv_c, stdv_c),
        "fc1_b": jax.random.uniform(ks[3], (c,), jnp.float32, -stdv_c, stdv_c),
        "ctx_w": [], "ctx_b": [], "conv_w": [],
    }
    for i in range(num_layers):
        k0, k1, k2 = ks[4 + 3 * i: 7 + 3 * i]
        params["ctx_w"].append(
            jax.random.uniform(k0, (hidden, K), jnp.float32, -stdv_k, stdv_k))
        params["ctx_b"].append(
            jax.random.uniform(k1, (K,), jnp.float32, -stdv_k, stdv_k))
        params["conv_w"].append(
            jax.random.uniform(k2, (K, hidden, hidden), jnp.float32, -stdv_h, stdv_h))
    return params


# -------------------------------- main --------------------------------------


if __name__ == "__main__":
    B, N, D, HIDDEN, K, C, NUM_LAYERS, E = 2, 16, 8, 32, 4, 4, 2, 48

    key = jax.random.PRNGKey(0)
    kx, ke, kp = jax.random.split(key, 3)

    x = jax.random.normal(kx, (B, N, D), jnp.float32)
    edge_index = jax.random.randint(ke, (B, 2, E), 0, N, dtype=jnp.int32)

    params = init_params(kp, D, HIDDEN, C, K, NUM_LAYERS)
    packed = prepare_params(params, NUM_LAYERS)   # one-time, off the fwd path

    out = pdggnn_forward(packed, x, edge_index, C)
    out = jax.block_until_ready(out)
    assert out.shape == (B, N, C) and out.dtype == jnp.float32
    assert bool(jnp.all(jnp.isfinite(out)))
    print("KERNEL_OK")
</pallas_src>

<mosaic_0001>
module attributes {stable_mosaic.version = 11 : i64} {
  func.func @_pdggnn_fused_kernel(%arg0: i32, %arg1: memref<1x2x48xi32, #tpu.memory_space<vmem>>, %arg2: memref<1x16x8xf32, #tpu.memory_space<vmem>>, %arg3: memref<8x128xbf16, #tpu.memory_space<vmem>>, %arg4: memref<1x128xf32, #tpu.memory_space<vmem>>, %arg5: memref<2x128x4xbf16, #tpu.memory_space<vmem>>, %arg6: memref<2x1x4xf32, #tpu.memory_space<vmem>>, %arg7: memref<2x128x512xbf16, #tpu.memory_space<vmem>>, %arg8: memref<128x128xbf16, #tpu.memory_space<vmem>>, %arg9: memref<1x128xf32, #tpu.memory_space<vmem>>, %arg10: memref<1x16x128xf32, #tpu.memory_space<vmem>>) attributes {dimension_semantics = [#tpu.dimension_semantics<parallel>], iteration_bounds = array<i64: 2>, scalar_prefetch = 0 : i64, scratch_operands = 0 : i64, tpu.core_type = #tpu.core_type<tc>, window_params = [{transform_indices = @transform_0, window_bounds = array<i64: 1, 2, 48>}, {transform_indices = @transform_1, window_bounds = array<i64: 1, 16, 8>}, {pipeline_mode = #tpu.pipeline_mode<synchronous>, transform_indices = @transform_2, window_bounds = array<i64: 8, 128>}, {pipeline_mode = #tpu.pipeline_mode<synchronous>, transform_indices = @transform_3, window_bounds = array<i64: 1, 128>}, {pipeline_mode = #tpu.pipeline_mode<synchronous>, transform_indices = @transform_4, window_bounds = array<i64: 2, 128, 4>}, {pipeline_mode = #tpu.pipeline_mode<synchronous>, transform_indices = @transform_5, window_bounds = array<i64: 2, 1, 4>}, {pipeline_mode = #tpu.pipeline_mode<synchronous>, transform_indices = @transform_6, window_bounds = array<i64: 2, 128, 512>}, {pipeline_mode = #tpu.pipeline_mode<synchronous>, transform_indices = @transform_7, window_bounds = array<i64: 128, 128>}, {pipeline_mode = #tpu.pipeline_mode<synchronous>, transform_indices = @transform_8, window_bounds = array<i64: 1, 128>}, {transform_indices = @transform_9, window_bounds = array<i64: 1, 16, 128>}]} {
    %c0 = arith.constant 0 : index
    %c0_0 = arith.constant 0 : index
    %c0_1 = arith.constant 0 : index
    %0 = vector.load %arg1[%c0, %c0_0, %c0_1] : memref<1x2x48xi32, #tpu.memory_space<vmem>>, vector<1x2x48xi32>
    %1 = vector.shape_cast %0 : vector<1x2x48xi32> to vector<2x48xi32>
    %2 = vector.extract_strided_slice %1 {offsets = [0, 0], sizes = [1, 48], strides = [1, 1]} : vector<2x48xi32> to vector<1x48xi32>
    %3 = vector.extract_strided_slice %1 {offsets = [1, 0], sizes = [1, 48], strides = [1, 1]} : vector<2x48xi32> to vector<1x48xi32>
    %4 = tpu.iota {dimensions = array<i32: 0>} : vector<16x48xi32>
    %5 = vector.broadcast %2 : vector<1x48xi32> to vector<16x48xi32>
    %6 = arith.cmpi eq, %4, %5 : vector<16x48xi32>
    %7 = arith.extui %6 : vector<16x48xi1> to vector<16x48xi32>
    %8 = arith.sitofp %7 : vector<16x48xi32> to vector<16x48xf32>
    %9 = vector.broadcast %3 : vector<1x48xi32> to vector<16x48xi32>
    %10 = arith.cmpi eq, %4, %9 : vector<16x48xi32>
    %11 = arith.extui %10 : vector<16x48xi1> to vector<16x48xi32>
    %12 = arith.sitofp %11 : vector<16x48xi32> to vector<16x48xf32>
    %cst = arith.constant dense<0.000000e+00> : vector<16x16xf32>
    %13 = tpu.matmul %8, %12, %cst {dimension_numbers = #tpu.dot_dimension_numbers<[1], [1], [0], [0], [0, 0, 1, 0], [], []>} : vector<16x48xf32>, vector<16x48xf32>, vector<16x16xf32> -> vector<16x16xf32>
    %14 = arith.truncf %13 : vector<16x16xf32> to vector<16x16xbf16>
    %c0_2 = arith.constant 0 : index
    %c0_3 = arith.constant 0 : index
    %c0_4 = arith.constant 0 : index
    %15 = vector.load %arg2[%c0_2, %c0_3, %c0_4] : memref<1x16x8xf32, #tpu.memory_space<vmem>>, vector<1x16x8xf32>
    %16 = vector.shape_cast %15 : vector<1x16x8xf32> to vector<16x8xf32>
    %17 = arith.truncf %16 : vector<16x8xf32> to vector<16x8xbf16>
    %c0_5 = arith.constant 0 : index
    %c0_6 = arith.constant 0 : index
    %18 = vector.load %arg3[%c0_5, %c0_6] : memref<8x128xbf16, #tpu.memory_space<vmem>>, vector<8x128xbf16>
    %cst_7 = arith.constant dense<0.000000e+00> : vector<16x128xf32>
    %19 = tpu.matmul %17, %18, %cst_7 {dimension_numbers = #tpu.dot_dimension_numbers<[1], [0], [0], [1], [0, 0, 1, 1], [], []>} : vector<16x8xbf16>, vector<8x128xbf16>, vector<16x128xf32> -> vector<16x128xf32>
    %c0_8 = arith.constant 0 : index
    %c0_9 = arith.constant 0 : index
    %20 = vector.load %arg4[%c0_8, %c0_9] : memref<1x128xf32, #tpu.memory_space<vmem>>, vector<1x128xf32>
    %21 = vector.broadcast %20 : vector<1x128xf32> to vector<16x128xf32>
    %22 = arith.addf %19, %21 : vector<16x128xf32>
    %cst_10 = arith.constant 0.000000e+00 : f32
    %23 = vector.broadcast %cst_10 : f32 to vector<16x128xf32>
    %24 = arith.maximumf %22, %23 : vector<16x128xf32>
    %25 = arith.truncf %24 : vector<16x128xf32> to vector<16x128xbf16>
    %c0_11 = arith.constant 0 : index
    %c0_12 = arith.constant 0 : index
    %c0_13 = arith.constant 0 : index
    %26 = vector.load %arg5[%c0_11, %c0_12, %c0_13] : memref<2x128x4xbf16, #tpu.memory_space<vmem>>, vector<1x128x4xbf16>
    %27 = vector.shape_cast %26 : vector<1x128x4xbf16> to vector<128x4xbf16>
    %cst_14 = arith.constant dense<0.000000e+00> : vector<16x4xf32>
    %28 = tpu.matmul %25, %27, %cst_14 {dimension_numbers = #tpu.dot_dimension_numbers<[1], [0], [0], [1], [0, 0, 1, 1], [], []>} : vector<16x128xbf16>, vector<128x4xbf16>, vector<16x4xf32> -> vector<16x4xf32>
    %c0_15 = arith.constant 0 : index
    %c0_16 = arith.constant 0 : index
    %c0_17 = arith.constant 0 : index
    %29 = vector.load %arg6[%c0_15, %c0_16, %c0_17] : memref<2x1x4xf32, #tpu.memory_space<vmem>>, vector<1x1x4xf32>
    %30 = vector.shape_cast %29 : vector<1x1x4xf32> to vector<1x4xf32>
    %31 = vector.broadcast %30 : vector<1x4xf32> to vector<16x4xf32>
    %32 = arith.addf %28, %31 : vector<16x4xf32>
    %cst_18 = arith.constant dense<0xFF800000> : vector<16xf32>
    %33 = vector.multi_reduction <maximumf>, %32, %cst_18 [1] : vector<16x4xf32> to vector<16xf32>
    %34 = vector.shape_cast %33 : vector<16xf32> to vector<16x1xf32>
    %35 = vector.broadcast %34 : vector<16x1xf32> to vector<16x4xf32>
    %36 = arith.subf %32, %35 : vector<16x4xf32>
    %37 = math.exp %36 : vector<16x4xf32>
    %cst_19 = arith.constant dense<0.000000e+00> : vector<16xf32>
    %38 = vector.multi_reduction <add>, %37, %cst_19 [1] : vector<16x4xf32> to vector<16xf32>
    %39 = vector.shape_cast %38 : vector<16xf32> to vector<16x1xf32>
    %40 = tpu.reciprocal %39 : vector<16x1xf32> -> vector<16x1xf32>
    %41 = vector.broadcast %40 : vector<16x1xf32> to vector<16x4xf32>
    %42 = arith.mulf %37, %41 : vector<16x4xf32>
    %cst_20 = arith.constant dense<0.000000e+00> : vector<16x128xf32>
    %43 = tpu.matmul %14, %25, %cst_20 {dimension_numbers = #tpu.dot_dimension_numbers<[1], [0], [0], [1], [0, 0, 1, 1], [], []>} : vector<16x16xbf16>, vector<16x128xbf16>, vector<16x128xf32> -> vector<16x128xf32>
    %44 = arith.truncf %43 : vector<16x128xf32> to vector<16x128xbf16>
    %c0_21 = arith.constant 0 : index
    %c0_22 = arith.constant 0 : index
    %c0_23 = arith.constant 0 : index
    %45 = vector.load %arg7[%c0_21, %c0_22, %c0_23] : memref<2x128x512xbf16, #tpu.memory_space<vmem>>, vector<1x128x512xbf16>
    %46 = vector.shape_cast %45 : vector<1x128x512xbf16> to vector<128x512xbf16>
    %cst_24 = arith.constant dense<0.000000e+00> : vector<16x512xf32>
    %47 = tpu.matmul %44, %46, %cst_24 {dimension_numbers = #tpu.dot_dimension_numbers<[1], [0], [0], [1], [0, 0, 1, 1], [], []>} : vector<16x128xbf16>, vector<128x512xbf16>, vector<16x512xf32> -> vector<16x512xf32>
    %48 = vector.extract_strided_slice %42 {offsets = [0, 0], sizes = [16, 1], strides = [1, 1]} : vector<16x4xf32> to vector<16x1xf32>
    %49 = vector.extract_strided_slice %47 {offsets = [0, 0], sizes = [16, 128], strides = [1, 1]} : vector<16x512xf32> to vector<16x128xf32>
    %50 = vector.broadcast %48 : vector<16x1xf32> to vector<16x128xf32>
    %51 = arith.mulf %50, %49 : vector<16x128xf32>
    %52 = vector.extract_strided_slice %42 {offsets = [0, 1], sizes = [16, 1], strides = [1, 1]} : vector<16x4xf32> to vector<16x1xf32>
    %53 = vector.extract_strided_slice %47 {offsets = [0, 128], sizes = [16, 128], strides = [1, 1]} : vector<16x512xf32> to vector<16x128xf32>
    %54 = vector.broadcast %52 : vector<16x1xf32> to vector<16x128xf32>
    %55 = arith.mulf %54, %53 : vector<16x128xf32>
    %56 = arith.addf %51, %55 : vector<16x128xf32>
    %57 = vector.extract_strided_slice %42 {offsets = [0, 2], sizes = [16, 1], strides = [1, 1]} : vector<16x4xf32> to vector<16x1xf32>
    %58 = vector.extract_strided_slice %47 {offsets = [0, 256], sizes = [16, 128], strides = [1, 1]} : vector<16x512xf32> to vector<16x128xf32>
    %59 = vector.broadcast %57 : vector<16x1xf32> to vector<16x128xf32>
    %60 = arith.mulf %59, %58 : vector<16x128xf32>
    %61 = arith.addf %56, %60 : vector<16x128xf32>
    %62 = vector.extract_strided_slice %42 {offsets = [0, 3], sizes = [16, 1], strides = [1, 1]} : vector<16x4xf32> to vector<16x1xf32>
    %63 = vector.extract_strided_slice %47 {offsets = [0, 384], sizes = [16, 128], strides = [1, 1]} : vector<16x512xf32> to vector<16x128xf32>
    %64 = vector.broadcast %62 : vector<16x1xf32> to vector<16x128xf32>
    %65 = arith.mulf %64, %63 : vector<16x128xf32>
    %66 = arith.addf %61, %65 : vector<16x128xf32>
    %67 = arith.addf %66, %24 : vector<16x128xf32>
    %cst_25 = arith.constant 0.000000e+00 : f32
    %68 = vector.broadcast %cst_25 : f32 to vector<16x128xf32>
    %69 = arith.maximumf %67, %68 : vector<16x128xf32>
    %70 = arith.truncf %69 : vector<16x128xf32> to vector<16x128xbf16>
    %c1 = arith.constant 1 : index
    %c0_26 = arith.constant 0 : index
    %c0_27 = arith.constant 0 : index
    %71 = vector.load %arg5[%c1, %c0_26, %c0_27] : memref<2x128x4xbf16, #tpu.memory_space<vmem>>, vector<1x128x4xbf16>
    %72 = vector.shape_cast %71 : vector<1x128x4xbf16> to vector<128x4xbf16>
    %cst_28 = arith.constant dense<0.000000e+00> : vector<16x4xf32>
    %73 = tpu.matmul %70, %72, %cst_28 {dimension_numbers = #tpu.dot_dimension_numbers<[1], [0], [0], [1], [0, 0, 1, 1], [], []>} : vector<16x128xbf16>, vector<128x4xbf16>, vector<16x4xf32> -> vector<16x4xf32>
    %c1_29 = arith.constant 1 : index
    %c0_30 = arith.constant 0 : index
    %c0_31 = arith.constant 0 : index
    %74 = vector.load %arg6[%c1_29, %c0_30, %c0_31] : memref<2x1x4xf32, #tpu.memory_space<vmem>>, vector<1x1x4xf32>
    %75 = vector.shape_cast %74 : vector<1x1x4xf32> to vector<1x4xf32>
    %76 = vector.broadcast %75 : vector<1x4xf32> to vector<16x4xf32>
    %77 = arith.addf %73, %76 : vector<16x4xf32>
    %cst_32 = arith.constant dense<0xFF800000> : vector<16xf32>
    %78 = vector.multi_reduction <maximumf>, %77, %cst_32 [1] : vector<16x4xf32> to vector<16xf32>
    %79 = vector.shape_cast %78 : vector<16xf32> to vector<16x1xf32>
    %80 = vector.broadcast %79 : vector<16x1xf32> to vector<16x4xf32>
    %81 = arith.subf %77, %80 : vector<16x4xf32>
    %82 = math.exp %81 : vector<16x4xf32>
    %cst_33 = arith.constant dense<0.000000e+00> : vector<16xf32>
    %83 = vector.multi_reduction <add>, %82, %cst_33 [1] : vector<16x4xf32> to vector<16xf32>
    %84 = vector.shape_cast %83 : vector<16xf32> to vector<16x1xf32>
    %85 = tpu.reciprocal %84 : vector<16x1xf32> -> vector<16x1xf32>
    %86 = vector.broadcast %85 : vector<16x1xf32> to vector<16x4xf32>
    %87 = arith.mulf %82, %86 : vector<16x4xf32>
    %cst_34 = arith.constant dense<0.000000e+00> : vector<16x128xf32>
    %88 = tpu.matmul %14, %70, %cst_34 {dimension_numbers = #tpu.dot_dimension_numbers<[1], [0], [0], [1], [0, 0, 1, 1], [], []>} : vector<16x16xbf16>, vector<16x128xbf16>, vector<16x128xf32> -> vector<16x128xf32>
    %89 = arith.truncf %88 : vector<16x128xf32> to vector<16x128xbf16>
    %c1_35 = arith.constant 1 : index
    %c0_36 = arith.constant 0 : index
    %c0_37 = arith.constant 0 : index
    %90 = vector.load %arg7[%c1_35, %c0_36, %c0_37] : memref<2x128x512xbf16, #tpu.memory_space<vmem>>, vector<1x128x512xbf16>
    %91 = vector.shape_cast %90 : vector<1x128x512xbf16> to vector<128x512xbf16>
    %cst_38 = arith.constant dense<0.000000e+00> : vector<16x512xf32>
    %92 = tpu.matmul %89, %91, %cst_38 {dimension_numbers = #tpu.dot_dimension_numbers<[1], [0], [0], [1], [0, 0, 1, 1], [], []>} : vector<16x128xbf16>, vector<128x512xbf16>, vector<16x512xf32> -> vector<16x512xf32>
    %93 = vector.extract_strided_slice %87 {offsets = [0, 0], sizes = [16, 1], strides = [1, 1]} : vector<16x4xf32> to vector<16x1xf32>
    %94 = vector.extract_strided_slice %92 {offsets = [0, 0], sizes = [16, 128], strides = [1, 1]} : vector<16x512xf32> to vector<16x128xf32>
    %95 = vector.broadcast %93 : vector<16x1xf32> to vector<16x128xf32>
    %96 = arith.mulf %95, %94 : vector<16x128xf32>
    %97 = vector.extract_strided_slice %87 {offsets = [0, 1], sizes = [16, 1], strides = [1, 1]} : vector<16x4xf32> to vector<16x1xf32>
    %98 = vector.extract_strided_slice %92 {offsets = [0, 128], sizes = [16, 128], strides = [1, 1]} : vector<16x512xf32> to vector<16x128xf32>
    %99 = vector.broadcast %97 : vector<16x1xf32> to vector<16x128xf32>
    %100 = arith.mulf %99, %98 : vector<16x128xf32>
    %101 = arith.addf %96, %100 : vector<16x128xf32>
    %102 = vector.extract_strided_slice %87 {offsets = [0, 2], sizes = [16, 1], strides = [1, 1]} : vector<16x4xf32> to vector<16x1xf32>
    %103 = vector.extract_strided_slice %92 {offsets = [0, 256], sizes = [16, 128], strides = [1, 1]} : vector<16x512xf32> to vector<16x128xf32>
    %104 = vector.broadcast %102 : vector<16x1xf32> to vector<16x128xf32>
    %105 = arith.mulf %104, %103 : vector<16x128xf32>
    %106 = arith.addf %101, %105 : vector<16x128xf32>
    %107 = vector.extract_strided_slice %87 {offsets = [0, 3], sizes = [16, 1], strides = [1, 1]} : vector<16x4xf32> to vector<16x1xf32>
    %108 = vector.extract_strided_slice %92 {offsets = [0, 384], sizes = [16, 128], strides = [1, 1]} : vector<16x512xf32> to vector<16x128xf32>
    %109 = vector.broadcast %107 : vector<16x1xf32> to vector<16x128xf32>
    %110 = arith.mulf %109, %108 : vector<16x128xf32>
    %111 = arith.addf %106, %110 : vector<16x128xf32>
    %112 = arith.addf %111, %69 : vector<16x128xf32>
    %cst_39 = arith.constant 0.000000e+00 : f32
    %113 = vector.broadcast %cst_39 : f32 to vector<16x128xf32>
    %114 = arith.maximumf %112, %113 : vector<16x128xf32>
    %115 = arith.truncf %114 : vector<16x128xf32> to vector<16x128xbf16>
    %c0_40 = arith.constant 0 : index
    %c0_41 = arith.constant 0 : index
    %116 = vector.load %arg8[%c0_40, %c0_41] : memref<128x128xbf16, #tpu.memory_space<vmem>>, vector<128x128xbf16>
    %cst_42 = arith.constant dense<0.000000e+00> : vector<16x128xf32>
    %117 = tpu.matmul %115, %116, %cst_42 {dimension_numbers = #tpu.dot_dimension_numbers<[1], [0], [0], [1], [0, 0, 1, 1], [], []>} : vector<16x128xbf16>, vector<128x128xbf16>, vector<16x128xf32> -> vector<16x128xf32>
    %c0_43 = arith.constant 0 : index
    %c0_44 = arith.constant 0 : index
    %118 = vector.load %arg9[%c0_43, %c0_44] : memref<1x128xf32, #tpu.memory_space<vmem>>, vector<1x128xf32>
    %119 = vector.broadcast %118 : vector<1x128xf32> to vector<16x128xf32>
    %120 = arith.addf %117, %119 : vector<16x128xf32>
    %c0_45 = arith.constant 0 : index
    %c0_46 = arith.constant 0 : index
    %c0_47 = arith.constant 0 : index
    %121 = vector.load %arg10[%c0_45, %c0_46, %c0_47] : memref<1x16x128xf32, #tpu.memory_space<vmem>>, vector<1x16x128xf32>
    %122 = vector.shape_cast %121 : vector<1x16x128xf32> to vector<16x128xf32>
    %123 = vector.shape_cast %120 : vector<16x128xf32> to vector<1x16x128xf32>
    tpu.vector_store %arg10[%c0_45, %c0_46, %c0_47], %123 {strides = array<i32>} : memref<1x16x128xf32, #tpu.memory_space<vmem>>, vector<1x16x128xf32>,
    return
  }
  func.func @transform_0(%arg0: i32) -> (i32, i32, i32) {
    %c0_i32 = arith.constant 0 : i32
    %c0_i32_0 = arith.constant 0 : i32
    %c0_i32_1 = arith.constant 0 : i32
    return %arg0, %c0_i32, %c0_i32_0 : i32, i32, i32
  }
  func.func @transform_1(%arg0: i32) -> (i32, i32, i32) {
    %c0_i32 = arith.constant 0 : i32
    %c0_i32_0 = arith.constant 0 : i32
    %c0_i32_1 = arith.constant 0 : i32
    return %arg0, %c0_i32, %c0_i32_0 : i32, i32, i32
  }
  func.func @transform_2(%arg0: i32) -> (i32, i32) {
    %c0_i32 = arith.constant 0 : i32
    %c0_i32_0 = arith.constant 0 : i32
    %c0_i32_1 = arith.constant 0 : i32
    return %c0_i32, %c0_i32_0 : i32, i32
  }
  func.func @transform_3(%arg0: i32) -> (i32, i32) {
    %c0_i32 = arith.constant 0 : i32
    %c0_i32_0 = arith.constant 0 : i32
    %c0_i32_1 = arith.constant 0 : i32
    return %c0_i32, %c0_i32_0 : i32, i32
  }
  func.func @transform_4(%arg0: i32) -> (i32, i32, i32) {
    %c0_i32 = arith.constant 0 : i32
    %c0_i32_0 = arith.constant 0 : i32
    %c0_i32_1 = arith.constant 0 : i32
    %c0_i32_2 = arith.constant 0 : i32
    return %c0_i32, %c0_i32_0, %c0_i32_1 : i32, i32, i32
  }
  func.func @transform_5(%arg0: i32) -> (i32, i32, i32) {
    %c0_i32 = arith.constant 0 : i32
    %c0_i32_0 = arith.constant 0 : i32
    %c0_i32_1 = arith.constant 0 : i32
    %c0_i32_2 = arith.constant 0 : i32
    return %c0_i32, %c0_i32_0, %c0_i32_1 : i32, i32, i32
  }
  func.func @transform_6(%arg0: i32) -> (i32, i32, i32) {
    %c0_i32 = arith.constant 0 : i32
    %c0_i32_0 = arith.constant 0 : i32
    %c0_i32_1 = arith.constant 0 : i32
    %c0_i32_2 = arith.constant 0 : i32
    return %c0_i32, %c0_i32_0, %c0_i32_1 : i32, i32, i32
  }
  func.func @transform_7(%arg0: i32) -> (i32, i32) {
    %c0_i32 = arith.constant 0 : i32
    %c0_i32_0 = arith.constant 0 : i32
    %c0_i32_1 = arith.constant 0 : i32
    return %c0_i32, %c0_i32_0 : i32, i32
  }
  func.func @transform_8(%arg0: i32) -> (i32, i32) {
    %c0_i32 = arith.constant 0 : i32
    %c0_i32_0 = arith.constant 0 : i32
    %c0_i32_1 = arith.constant 0 : i32
    return %c0_i32, %c0_i32_0 : i32, i32
  }
  func.func @transform_9(%arg0: i32) -> (i32, i32, i32) {
    %c0_i32 = arith.constant 0 : i32
    %c0_i32_0 = arith.constant 0 : i32
    %c0_i32_1 = arith.constant 0 : i32
    return %arg0, %c0_i32, %c0_i32_0 : i32, i32, i32
  }
}

</mosaic_0001>

<llo_original>
// kernel: pdggnn_forward.1
$region0: #{pdggnn_forward.1}
  #allocation0 [shape = 'u32[]', space=smem, size = 0x4, offset = 0x4, fixed_abs, tag = 'smem constant byte address 0x4 - core index']
  #allocation1 [shape = 'u32[72,128]{1,0:T(1,128)}', space=vmem, size = 0x9000, scoped, tag = 'internal scratch']
  %s0 = inlined_call_operand.vmem [shape: s32[2,2,48], index: 0, kind: input, shape index: {}]
  %s1 = inlined_call_operand.vmem [shape: f32[2,16,8], index: 1, kind: input, shape index: {}]
  %s2 = inlined_call_operand.vmem [shape: bf16[8,128], index: 2, kind: input, shape index: {}]
  %s3 = inlined_call_operand.vmem [shape: f32[1,128], index: 3, kind: input, shape index: {}]
  %s4 = inlined_call_operand.vmem [shape: bf16[2,128,4], index: 4, kind: input, shape index: {}]
  %s5 = inlined_call_operand.vmem [shape: f32[2,1,4], index: 5, kind: input, shape index: {}]
  %s6 = inlined_call_operand.hbm [shape: bf16[2,128,512], index: 6, kind: input, shape index: {}]
  %s7 = inlined_call_operand.vmem [shape: bf16[128,128], index: 7, kind: input, shape index: {}]
  %s8 = inlined_call_operand.vmem [shape: f32[1,128], index: 8, kind: input, shape index: {}]
  %s9 = inlined_call_operand.vmem [shape: f32[2,16,128], index: 9, kind: output, shape index: {}]
  %s10 = sld [smem:[#allocation0]]
  $region73: #{pdggnn_forward.1} parent=0
    _
  %s12 = ssub.s32 1, %s10
  %s13 = scalar_select 0, %s12, %s10
  $region1: #{pdggnn_forward.1} parent=0
    #allocation2 [shape = 'u8[262144]{0}', space=vmem, size = 0x40000, scoped, tag = 'input window, operand 6, single buffered']
    #allocation3 [shape = 's32[2]{0}', space=sflag, size = 0x8, scoped, tag = 'scoped memory for pdggnn_forward.1']
    %14 = vsyncpa [#allocation3], 0
    loop: start=0, step=1, limit=4
    $region2: #{pdggnn_forward.1} parent=1 // loop_pre_header
      _
    $region3: #{pdggnn_forward.1} parent=1 // loop_header
      %s16 = sphi 0, %s20
      %p17 = scmp.ge.s32.totalorder %s16, 4
      %s26 = sphi 0, %s28
      %s29 = sphi 0, %s26
      %s30 = sphi 0, %s29
      %s46 = sphi 0, %s30
      %s52 = sphi 0, %s54
      %s55 = sphi 0, %s52
      %s56 = sphi 0, %s55
      %s72 = sphi 0, %s56
      %s76 = sphi 0, %s76
      %s78 = sphi 0, %s76
      %s79 = sphi 0, %s78
      %s93 = sphi 0, %s79
      %s97 = sphi 0, %s97
      %s99 = sphi 0, %s97
      %s100 = sphi 0, %s99
      %s114 = sphi 0, %s100
      %s118 = sphi 0, %s118
      %s120 = sphi 0, %s118
      %s121 = sphi 0, %s120
      %s135 = sphi 0, %s121
      %s139 = sphi 0, %s139
      %s141 = sphi 0, %s139
      %s142 = sphi 0, %s141
      %s156 = sphi 0, %s142
      %s160 = sphi 0, %s160
      %s162 = sphi 0, %s160
      %s163 = sphi 0, %s162
      %s177 = sphi 0, %s163
      %s181 = sphi 0, %s181
      %s183 = sphi 0, %s181
      %s184 = sphi 0, %s183
      %s198 = sphi 0, %s184
      %s202 = sphi 0, %s202
      %s204 = sphi 0, %s202
      %s205 = sphi 0, %s204
      %s219 = sphi 0, %s205
      %s225 = sphi 0, %s227
      %s228 = sphi 0, %s225
      %s229 = sphi 0, %s228
      %s245 = sphi 0, %s229
    $region4: #{pdggnn_forward.1} parent=1 // loop_header_branch
      %19 = sbr.rel (%p17) target = $region8
    $region5: #{pdggnn_forward.1} parent=1 // loop_body
      %s21 = ssub.s32 %s16, 1
      %s22 = ssub.s32 %s16, 2
      %s23 = sadd.s32 %s16, 1
      %s24 = ssub.s32 %s16, %s23
      %p25 = scmp.eq.s32.totalorder %s24, 0
      %s27 = sadd.s32 %s26, 1
      %s28 = scalar_select %p25, %s26, %s27
      %p31 = pneg %p25
      %p32 = scmp.eq.s32.totalorder %s16, 1
      %p33 = por %p31, %p32
      %p34 = scmp.ne.s32.totalorder %s26, %s29
      %p35 = scmp.eq.s32.totalorder %s16, 0
      %p36 = por %p34, %p35
      %p37 = scmp.ne.s32.totalorder %s26, %s29
      %p38 = scmp.eq.s32.totalorder %s21, 1
      %p39 = por %p37, %p38
      %p40 = scmp.ne.s32.totalorder %s29, %s30
      %p41 = scmp.eq.s32.totalorder %s21, 0
      %p42 = por %p40, %p41
      %p43 = scmp.ne.s32.totalorder %s29, %s30
      %p44 = scmp.eq.s32.totalorder %s22, 1
      %p45 = por %p43, %p44
      %p47 = scmp.ne.s32.totalorder %s30, %s46
      %p48 = scmp.eq.s32.totalorder %s22, 0
      %p49 = por %p47, %p48
      %s50 = ssub.s32 %s16, %s23
      %p51 = scmp.eq.s32.totalorder %s50, 0
      %s53 = sadd.s32 %s52, 1
      %s54 = scalar_select %p51, %s52, %s53
      %p57 = pneg %p51
      %p58 = scmp.eq.s32.totalorder %s16, 1
      %p59 = por %p57, %p58
      %p60 = scmp.ne.s32.totalorder %s52, %s55
      %p61 = scmp.eq.s32.totalorder %s16, 0
      %p62 = por %p60, %p61
      %p63 = scmp.ne.s32.totalorder %s52, %s55
      %p64 = scmp.eq.s32.totalorder %s21, 1
      %p65 = por %p63, %p64
      %p66 = scmp.ne.s32.totalorder %s55, %s56
      %p67 = scmp.eq.s32.totalorder %s21, 0
      %p68 = por %p66, %p67
      %p69 = scmp.ne.s32.totalorder %s55, %s56
      %p70 = scmp.eq.s32.totalorder %s22, 1
      %p71 = por %p69, %p70
      %p73 = scmp.ne.s32.totalorder %s56, %s72
      %p74 = scmp.eq.s32.totalorder %s22, 0
      %p75 = por %p73, %p74
      %s77 = sadd.s32 %s76, 1
      %p80 = scmp.eq.s32.totalorder %s16, 1
      %p81 = scmp.ne.s32.totalorder %s76, %s78
      %p82 = scmp.eq.s32.totalorder %s16, 0
      %p83 = por %p81, %p82
      %p84 = scmp.ne.s32.totalorder %s76, %s78
      %p85 = scmp.eq.s32.totalorder %s21, 1
      %p86 = por %p84, %p85
      %p87 = scmp.ne.s32.totalorder %s78, %s79
      %p88 = scmp.eq.s32.totalorder %s21, 0
      %p89 = por %p87, %p88
      %p90 = scmp.ne.s32.totalorder %s78, %s79
      %p91 = scmp.eq.s32.totalorder %s22, 1
      %p92 = por %p90, %p91
      %p94 = scmp.ne.s32.totalorder %s79, %s93
      %p95 = scmp.eq.s32.totalorder %s22, 0
      %p96 = por %p94, %p95
      %s98 = sadd.s32 %s97, 1
      %p101 = scmp.eq.s32.totalorder %s16, 1
      %p102 = scmp.ne.s32.totalorder %s97, %s99
      %p103 = scmp.eq.s32.totalorder %s16, 0
      %p104 = por %p102, %p103
      %p105 = scmp.ne.s32.totalorder %s97, %s99
      %p106 = scmp.eq.s32.totalorder %s21, 1
      %p107 = por %p105, %p106
      %p108 = scmp.ne.s32.totalorder %s99, %s100
      %p109 = scmp.eq.s32.totalorder %s21, 0
      %p110 = por %p108, %p109
      %p111 = scmp.ne.s32.totalorder %s99, %s100
      %p112 = scmp.eq.s32.totalorder %s22, 1
      %p113 = por %p111, %p112
      %p115 = scmp.ne.s32.totalorder %s100, %s114
      %p116 = scmp.eq.s32.totalorder %s22, 0
      %p117 = por %p115, %p116
      %s119 = sadd.s32 %s118, 1
      %p122 = scmp.eq.s32.totalorder %s16, 1
      %p123 = scmp.ne.s32.totalorder %s118, %s120
      %p124 = scmp.eq.s32.totalorder %s16, 0
      %p125 = por %p123, %p124
      %p126 = scmp.ne.s32.totalorder %s118, %s120
      %p127 = scmp.eq.s32.totalorder %s21, 1
      %p128 = por %p126, %p127
      %p129 = scmp.ne.s32.totalorder %s120, %s121
      %p130 = scmp.eq.s32.totalorder %s21, 0
      %p131 = por %p129, %p130
      %p132 = scmp.ne.s32.totalorder %s120, %s121
      %p133 = scmp.eq.s32.totalorder %s22, 1
      %p134 = por %p132, %p133
      %p136 = scmp.ne.s32.totalorder %s121, %s135
      %p137 = scmp.eq.s32.totalorder %s22, 0
      %p138 = por %p136, %p137
      %s140 = sadd.s32 %s139, 1
      %p143 = scmp.eq.s32.totalorder %s16, 1
      %p144 = scmp.ne.s32.totalorder %s139, %s141
      %p145 = scmp.eq.s32.totalorder %s16, 0
      %p146 = por %p144, %p145
      %p147 = scmp.ne.s32.totalorder %s139, %s141
      %p148 = scmp.eq.s32.totalorder %s21, 1
      %p149 = por %p147, %p148
      %p150 = scmp.ne.s32.totalorder %s141, %s142
      %p151 = scmp.eq.s32.totalorder %s21, 0
      %p152 = por %p150, %p151
      %p153 = scmp.ne.s32.totalorder %s141, %s142
      %p154 = scmp.eq.s32.totalorder %s22, 1
      %p155 = por %p153, %p154
      %p157 = scmp.ne.s32.totalorder %s142, %s156
      %p158 = scmp.eq.s32.totalorder %s22, 0
      %p159 = por %p157, %p158
      %s161 = sadd.s32 %s160, 1
      %p164 = scmp.eq.s32.totalorder %s16, 1
      %p165 = scmp.ne.s32.totalorder %s160, %s162
      %p166 = scmp.eq.s32.totalorder %s16, 0
      %p167 = por %p165, %p166
      %p168 = scmp.ne.s32.totalorder %s160, %s162
      %p169 = scmp.eq.s32.totalorder %s21, 1
      %p170 = por %p168, %p169
      %p171 = scmp.ne.s32.totalorder %s162, %s163
      %p172 = scmp.eq.s32.totalorder %s21, 0
      %p173 = por %p171, %p172
      %p174 = scmp.ne.s32.totalorder %s162, %s163
      %p175 = scmp.eq.s32.totalorder %s22, 1
      %p176 = por %p174, %p175
      %p178 = scmp.ne.s32.totalorder %s163, %s177
      %p179 = scmp.eq.s32.totalorder %s22, 0
      %p180 = por %p178, %p179
      %s182 = sadd.s32 %s181, 1
      %p185 = scmp.eq.s32.totalorder %s16, 1
      %p186 = scmp.ne.s32.totalorder %s181, %s183
      %p187 = scmp.eq.s32.totalorder %s16, 0
      %p188 = por %p186, %p187
      %p189 = scmp.ne.s32.totalorder %s181, %s183
      %p190 = scmp.eq.s32.totalorder %s21, 1
      %p191 = por %p189, %p190
      %p192 = scmp.ne.s32.totalorder %s183, %s184
      %p193 = scmp.eq.s32.totalorder %s21, 0
      %p194 = por %p192, %p193
      %p195 = scmp.ne.s32.totalorder %s183, %s184
      %p196 = scmp.eq.s32.totalorder %s22, 1
      %p197 = por %p195, %p196
      %p199 = scmp.ne.s32.totalorder %s184, %s198
      %p200 = scmp.eq.s32.totalorder %s22, 0
      %p201 = por %p199, %p200
      %s203 = sadd.s32 %s202, 1
      %p206 = scmp.eq.s32.totalorder %s16, 1
      %p207 = scmp.ne.s32.totalorder %s202, %s204
      %p208 = scmp.eq.s32.totalorder %s16, 0
      %p209 = por %p207, %p208
      %p210 = scmp.ne.s32.totalorder %s202, %s204
      %p211 = scmp.eq.s32.totalorder %s21, 1
      %p212 = por %p210, %p211
      %p213 = scmp.ne.s32.totalorder %s204, %s205
      %p214 = scmp.eq.s32.totalorder %s21, 0
      %p215 = por %p213, %p214
      %p216 = scmp.ne.s32.totalorder %s204, %s205
      %p217 = scmp.eq.s32.totalorder %s22, 1
      %p218 = por %p216, %p217
      %p220 = scmp.ne.s32.totalorder %s205, %s219
      %p221 = scmp.eq.s32.totalorder %s22, 0
      %p222 = por %p220, %p221
      %s223 = ssub.s32 %s16, %s23
      %p224 = scmp.eq.s32.totalorder %s223, 0
      %s226 = sadd.s32 %s225, 1
      %s227 = scalar_select %p224, %s225, %s226
      %p230 = pneg %p224
      %p231 = scmp.eq.s32.totalorder %s16, 1
      %p232 = por %p230, %p231
      %p233 = scmp.ne.s32.totalorder %s225, %s228
      %p234 = scmp.eq.s32.totalorder %s16, 0
      %p235 = por %p233, %p234
      %p236 = scmp.ne.s32.totalorder %s225, %s228
      %p237 = scmp.eq.s32.totalorder %s21, 1
      %p238 = por %p236, %p237
      %p239 = scmp.ne.s32.totalorder %s228, %s229
      %p240 = scmp.eq.s32.totalorder %s21, 0
      %p241 = por %p239, %p240
      %p242 = scmp.ne.s32.totalorder %s228, %s229
      %p243 = scmp.eq.s32.totalorder %s22, 1
      %p244 = por %p242, %p243
      %p246 = scmp.ne.s32.totalorder %s229, %s245
      %p247 = scmp.eq.s32.totalorder %s22, 0
      %p248 = por %p246, %p247
      %p249 = scmp.le.s32.totalorder 1, %s16
      %p250 = scmp.lt.s32.totalorder %s16, 3
      %p251 = pnand %p249, %p250
      %p252 = pneg %p251
      // Predicated region
      $region9: #{pdggnn_forward.1} parent=5 // pred_check
        _
      $region10: #{pdggnn_forward.1} parent=5 // pred_check_branch
        %254 = sbr.rel (%p251) target = $region12
      $region11: #{pdggnn_forward.1} parent=5 // pred_region
        %s255 = ssub.s32 %s16, 1
        // Predicated region
        $region13: #{pdggnn_forward.1} parent=11 // pred_check
          %p256 = pneg %p89
        $region14: #{pdggnn_forward.1} parent=11 // pred_check_branch
          %258 = sbr.rel (%p256) target = $region16
        $region15: #{pdggnn_forward.1} parent=11 // pred_region
          _
        $region16: #{pdggnn_forward.1} parent=11 // pred_fallthru
          _
        // Predicated region
        $region17: #{pdggnn_forward.1} parent=11 // pred_check
          %p259 = pneg %p110
        $region18: #{pdggnn_forward.1} parent=11 // pred_check_branch
          %261 = sbr.rel (%p259) target = $region20
        $region19: #{pdggnn_forward.1} parent=11 // pred_region
          _
        $region20: #{pdggnn_forward.1} parent=11 // pred_fallthru
          _
        // Predicated region
        $region21: #{pdggnn_forward.1} parent=11 // pred_check
          %p262 = pneg %p131
        $region22: #{pdggnn_forward.1} parent=11 // pred_check_branch
          %264 = sbr.rel (%p262) target = $region24
        $region23: #{pdggnn_forward.1} parent=11 // pred_region
          _
        $region24: #{pdggnn_forward.1} parent=11 // pred_fallthru
          _
        // Predicated region
        $region25: #{pdggnn_forward.1} parent=11 // pred_check
          %p265 = pneg %p152
        $region26: #{pdggnn_forward.1} parent=11 // pred_check_branch
          %267 = sbr.rel (%p265) target = $region28
        $region27: #{pdggnn_forward.1} parent=11 // pred_region
          _
        $region28: #{pdggnn_forward.1} parent=11 // pred_fallthru
          _
        // Predicated region
        $region29: #{pdggnn_forward.1} parent=11 // pred_check
          %p268 = pneg %p173
        $region30: #{pdggnn_forward.1} parent=11 // pred_check_branch
          %270 = sbr.rel (%p268) target = $region32
        $region31: #{pdggnn_forward.1} parent=11 // pred_region
          %272 = vsyncadd [#allocation3], 0
          %s273 = sshll.u32 %s6, 4
          %s274 = int_to_ptr.hbm [resolvable:$true] %s273
          %s275 = sshll.u32 [#allocation2], 4
          %s276 = int_to_ptr.vmem [resolvable:$true] %s275
          %281 = dma.hbm_to_vmem [thread:$0]  %s274, 8192, %s276, [#allocation3], 256, 256, 16
        $region32: #{pdggnn_forward.1} parent=11 // pred_fallthru
          _
        // Predicated region
        $region33: #{pdggnn_forward.1} parent=11 // pred_check
          %p282 = pneg %p194
        $region34: #{pdggnn_forward.1} parent=11 // pred_check_branch
          %284 = sbr.rel (%p282) target = $region36
        $region35: #{pdggnn_forward.1} parent=11 // pred_region
          _
        $region36: #{pdggnn_forward.1} parent=11 // pred_fallthru
          _
        // Predicated region
        $region37: #{pdggnn_forward.1} parent=11 // pred_check
          %p285 = pneg %p215
        $region38: #{pdggnn_forward.1} parent=11 // pred_check_branch
          %287 = sbr.rel (%p285) target = $region40
        $region39: #{pdggnn_forward.1} parent=11 // pred_region
          _
        $region40: #{pdggnn_forward.1} parent=11 // pred_fallthru
          _
      $region12: #{pdggnn_forward.1} parent=5 // pred_fallthru
        _
      %p288 = scmp.lt.s32.totalorder %s16, 2
      // Predicated region
      $region41: #{pdggnn_forward.1} parent=5 // pred_check
        %p289 = pneg %p288
      $region42: #{pdggnn_forward.1} parent=5 // pred_check_branch
        %291 = sbr.rel (%p289) target = $region44
      $region43: #{pdggnn_forward.1} parent=5 // pred_region
        // Predicated region
        $region45: #{pdggnn_forward.1} parent=43 // pred_check
          %p292 = pneg %p36
        $region46: #{pdggnn_forward.1} parent=43 // pred_check_branch
          %294 = sbr.rel (%p292) target = $region48
        $region47: #{pdggnn_forward.1} parent=43 // pred_region
          %p295 = scmp.lt.s32.totalorder %s16, 1
          %s296 = scalar_select %p295, %s16, 1
          %s297 = smul.addr %s296, 2
          %s298 = scalar_lea.vmem %s0, %s297
        $region48: #{pdggnn_forward.1} parent=43 // pred_fallthru
          _
        // Predicated region
        $region49: #{pdggnn_forward.1} parent=43 // pred_check
          %p299 = pneg %p62
        $region50: #{pdggnn_forward.1} parent=43 // pred_check_branch
          %301 = sbr.rel (%p299) target = $region52
        $region51: #{pdggnn_forward.1} parent=43 // pred_region
          %p302 = scmp.lt.s32.totalorder %s16, 1
          %s303 = scalar_select %p302, %s16, 1
          %s304 = smul.addr %s303, 2
          %s305 = smul.addr %s304, 8
          %s306 = scalar_lea.vmem %s1, %s305
        $region52: #{pdggnn_forward.1} parent=43 // pred_fallthru
          _
      $region44: #{pdggnn_forward.1} parent=5 // pred_fallthru
        _
      %p307 = scmp.le.s32.totalorder 1, %s16
      %p308 = scmp.lt.s32.totalorder %s16, 3
      %p309 = pnand %p307, %p308
      %p310 = pneg %p309
      // Predicated region
      $region53: #{pdggnn_forward.1} parent=5 // pred_check
        _
      $region54: #{pdggnn_forward.1} parent=5 // pred_check_branch
        %312 = sbr.rel (%p309) target = $region56
      $region55: #{pdggnn_forward.1} parent=5 // pred_region
        %s313 = ssub.s32 %s16, 1
        // Predicated region
        $region57: #{pdggnn_forward.1} parent=55 // pred_check
          %p314 = pneg %p173
        $region58: #{pdggnn_forward.1} parent=55 // pred_check_branch
          %316 = sbr.rel (%p314) target = $region60
        $region59: #{pdggnn_forward.1} parent=55 // pred_region
          %318 = dma.done [#allocation3], 8192
        $region60: #{pdggnn_forward.1} parent=55 // pred_fallthru
          _
        %p319 = scmp.lt.s32.totalorder %s21, 1
        %s320 = scalar_select %p319, %s21, 1
        %s321 = smul.addr %s320, 2
        %s322 = scalar_lea.vmem %s0, %s321
        %p323 = pneg %p42
        %p324 = pneg %p39
        %p325 = scmp.lt.s32.totalorder %s21, 1
        %s326 = scalar_select %p325, %s21, 1
        %s327 = smul.addr %s326, 2
        %s328 = smul.addr %s327, 8
        %s329 = scalar_lea.vmem %s1, %s328
        %p330 = pneg %p68
        %p331 = pneg %p65
        %p332 = pneg %p89
        %p333 = pneg %p86
        %p334 = pneg %p110
        %p335 = pneg %p107
        %p336 = pneg %p131
        %p337 = pneg %p128
        %p338 = pneg %p152
        %p339 = pneg %p149
        %p340 = pneg %p173
        %p341 = pneg %p170
        %p342 = pneg %p194
        %p343 = pneg %p191
        %p344 = pneg %p215
        %p345 = pneg %p212
        %p346 = pneg %p241
        %p347 = pneg %p238
        %p348 = scmp.lt.s32.totalorder %s21, 1
        %s349 = scalar_select %p348, %s21, 1
        %s350 = smul.addr %s349, 2
        %s351 = smul.addr %s350, 8
        %s352 = scalar_lea.vmem %s9, %s351
        %p353 = scmp.lt.s32.totalorder %s21, 1
        %s354 = scalar_select %p353, %s21, 1
        %s355 = smul.addr %s354, 2
        %s356 = scalar_lea.vmem %s0, %s355
        %p357 = scmp.lt.s32.totalorder %s21, 1
        %s358 = scalar_select %p357, %s21, 1
        %s359 = smul.addr %s358, 2
        %s360 = smul.addr %s359, 8
        %s361 = scalar_lea.vmem %s1, %s360
        %p362 = scmp.lt.s32.totalorder %s21, 1
        %s363 = scalar_select %p362, %s21, 1
        %s364 = smul.addr %s363, 2
        %s365 = smul.addr %s364, 8
        %s366 = scalar_lea.vmem %s9, %s365
        %v368 = vld [vmem:[%s356] sm:$0x3]
        %v369 = vlaneseq
        %v370 = vshrl.u32 %v369, 7
        %v371 = vadd.s32 %v370, 8
        %v372 = vperm.slane %v368, 0
        %vm373 = vcmp.eq.s32.totalorder %v370, %v372
        %vm374 = vcmp.eq.s32.totalorder %v371, %v372
        %v375 = vsel %vm373, 1, 0
        %v376 = vsel %vm374, 1, 0
        %v377 = vcvt.s32.f32 %v375
        %v378 = vcvt.s32.f32 %v376
        %v379 = vperm.slane %v368, 1
        %vm380 = vcmp.eq.s32.totalorder %v370, %v379
        %vm381 = vcmp.eq.s32.totalorder %v371, %v379
        %v382 = vsel %vm380, 1, 0
        %v383 = vsel %vm381, 1, 0
        %v384 = vcvt.s32.f32 %v382
        %v385 = vcvt.s32.f32 %v383
        %vm386 = vcmask 392192
        %v388 = vsel %vm386, %v377, 0
        %v391 = vsel %vm386, %v378, 0
        %v394 = vsel %vm386, %v384, 0
        %v397 = vsel %vm386, %v385, 0
        %399 = vmatpush.xpose.msra.mxu0 0.0
        %400 = vmatpush.xpose.msra.mxu0 0.0
        %401 = vmatpush.xpose.msra.mxu0 0.0
        %402 = vmatpush.xpose.msra.mxu0 0.0
        %403 = vmatpush.xpose.msra.mxu0 0.0
        %404 = vmatpush.xpose.msra.mxu0 0.0
        %405 = vmatpush.xpose.msra.mxu0 0.0
        %406 = vmatpush.xpose.msra.mxu0 0.0
        %407 = vmatpush.xpose.msra.mxu0 0.0
        %408 = vmatpush.xpose.msra.mxu0 0.0
        %409 = vmatpush.xpose.msra.mxu0 0.0
        %410 = vmatpush.xpose.msra.mxu0 0.0
        %411 = vmatpush.xpose.msra.mxu0 0.0
        %412 = vmatpush.xpose.msra.mxu0 0.0
        %413 = vmatpush.xpose.msra.mxu0 %v397
        %414 = vmatpush.xpose.msra.mxu0 %v394
        %415 = vmatmul.f32.gmra.mxu0 %v388
        %v416 = vpop.f32.mrf.mxu0
        %v417 = vadd.f32 0.0, %v416
        %418 = vmatmul.f32.gmra.mxu0 %v391
        %v419 = vpop.f32.mrf.mxu0
        %v420 = vadd.f32 0.0, %v419
        %421 = vdwg.mxu0
        %v422 = vpack.c.bf16 %v420, %v417
        %v423 = vld [vmem:[%s361] sm:$0xff]
        %v424 = vld [vmem:[%s361 + $0x8] sm:$0xff]
        %v425 = vpack.c.bf16 %v424, %v423
        %v426 = vld [vmem:[%s2] sm:$0xf]
        %v427 = vld [vmem:[%s3] sm:$0x1]
        %v429 = vperm.slane %v427, 0
        %vm431 = vcmask 64512
        %v433 = vsel %vm431, %v425, 0
        %vm435 = vcmask 1043456
        %v437 = vsel %vm435, %v426, 0
        %439 = vmatpush.bf16.msra.mxu0 0
        %440 = vmatpush.bf16.msra.mxu0 0
        %441 = vmatpush.bf16.msra.mxu0 0
        %442 = vmatpush.bf16.msra.mxu0 0
        %443 = vmatpush.bf16.msra.mxu0 0
        %444 = vmatpush.bf16.msra.mxu0 0
        %445 = vmatpush.bf16.msra.mxu0 0
        %446 = vmatpush.bf16.msra.mxu0 %v437
        %447 = vmatmul.bf16.gmra.mxu0 %v433
        %v448 = vpop.f32.mrf.mxu0
        %v449 = vadd.f32 %v429, %v448
        %v450 = vpop.f32.mrf.mxu0
        %v451 = vadd.f32 %v429, %v450
        %452 = vdwg.mxu0
        %v453 = vmax.f32 %v449, 0.0
        %v454 = vmax.f32 %v451, 0.0
        %v455 = vpack.c.bf16 %v454, %v453
        %v456 = vld [vmem:[%s4] sm:$0xf]
        %v457 = vld [vmem:[%s4 + $0x4] sm:$0xf]
        %v458 = vld [vmem:[%s4 + $0x8] sm:$0xf]
        %v459 = vld [vmem:[%s4 + $0xc] sm:$0xf]
        %v460 = vld [vmem:[%s4 + $0x10] sm:$0xf]
        %v461 = vld [vmem:[%s4 + $0x14] sm:$0xf]
        %v462 = vld [vmem:[%s4 + $0x18] sm:$0xf]
        %v463 = vld [vmem:[%s4 + $0x1c] sm:$0xf]
        %v464 = vld [vmem:[%s4 + $0x20] sm:$0xf]
        %v465 = vld [vmem:[%s4 + $0x24] sm:$0xf]
        %v466 = vld [vmem:[%s4 + $0x28] sm:$0xf]
        %v467 = vld [vmem:[%s4 + $0x2c] sm:$0xf]
        %v468 = vld [vmem:[%s4 + $0x30] sm:$0xf]
        %v469 = vld [vmem:[%s4 + $0x34] sm:$0xf]
        %v470 = vld [vmem:[%s4 + $0x38] sm:$0xf]
        %v471 = vld [vmem:[%s4 + $0x3c] sm:$0xf]
        %v472 = vld [vmem:[%s5] sm:$0x1]
        %v474 = vperm.slane %v472, 0
        %v492 = vunpack.c.l.b16 %v456
        %v493 = vunpack.c.l.b16 %v457
        %v494 = vunpack.c.l.b16 %v458
        %v495 = vunpack.c.l.b16 %v459
        %v496 = vunpack.c.l.b16 %v460
        %v497 = vunpack.c.l.b16 %v461
        %v498 = vunpack.c.l.b16 %v462
        %v499 = vunpack.c.l.b16 %v463
        %v500 = vunpack.c.l.b16 %v464
        %v501 = vunpack.c.l.b16 %v465
        %v502 = vunpack.c.l.b16 %v466
        %v503 = vunpack.c.l.b16 %v467
        %v504 = vunpack.c.l.b16 %v468
        %v505 = vunpack.c.l.b16 %v469
        %v506 = vunpack.c.l.b16 %v470
        %v507 = vunpack.c.l.b16 %v471
        %v508 = vpack.c.b16 %v493, %v492
        %v509 = vpack.c.b16 %v495, %v494
        %v510 = vpack.c.b16 %v497, %v496
        %v511 = vpack.c.b16 %v499, %v498
        %v512 = vpack.c.b16 %v501, %v500
        %v513 = vpack.c.b16 %v503, %v502
        %v514 = vpack.c.b16 %v505, %v504
        %v515 = vpack.c.b16 %v507, %v506
        %524 = vmatpush.bf16.msra.mxu0 %v515
        %525 = vmatpush.bf16.msra.mxu0 %v514
        %526 = vmatpush.bf16.msra.mxu0 %v513
        %527 = vmatpush.bf16.msra.mxu0 %v512
        %528 = vmatpush.bf16.msra.mxu0 %v511
        %529 = vmatpush.bf16.msra.mxu0 %v510
        %530 = vmatpush.bf16.msra.mxu0 %v509
        %531 = vmatpush.bf16.msra.mxu0 %v508
        %532 = vmatmul.bf16.gmra.mxu0 %v455
        %v533 = vpop.f32.mrf.mxu0
        %v534 = vadd.f32 %v474, %v533
        %v535 = vpop.f32.mrf.mxu0
        %v536 = vadd.f32 %v474, %v535
        %537 = vdwg.mxu0
        %vm538 = vcmask 31744
        %v539 = vsel %vm538, %v534, -inf
        %540 = vmax.xlane.f32.xlu0 %v539
        %v541 = vpop.xlane.xlu0 %540
        %v542 = vsel %vm538, %v536, -inf
        %543 = vmax.xlane.f32.xlu0 %v542
        %v544 = vpop.xlane.xlu0 %543
        %v545 = vsub.f32 %v534, %v541
        %v546 = vsub.f32 %v536, %v544
        %v547 = vmul.f32 %v545, 1.442695
        %v548 = vpow.pop %v547
        %v549 = vmul.f32 %v546, 1.442695
        %v550 = vpow.pop %v549
        %v551 = vsel %vm538, %v548, 0.0
        %552 = vadd.xlane.f32.xlu0 %v551
        %v553 = vpop.xlane.xlu0 %552
        %v554 = vsel %vm538, %v550, 0.0
        %555 = vadd.xlane.f32.xlu0 %v554
        %v556 = vpop.xlane.xlu0 %555
        %v557 = vrcp.pop %v553
        %v558 = vmul.f32 %v553, %v557
        %v559 = vsub.f32 1.0, %v558
        %v560 = vmul.f32 %v557, %v559
        %v561 = vadd.f32 %v557, %v560
        %vm562 = vweird.f32 %v553
        %vm563 = vweird.f32 %v557
        %vm564 = vmor %vm562, %vm563
        %v565 = vsel %vm564, %v557, %v561
        %v566 = vand.u32 2147483647, %v553
        %vm567 = vcmp.eq.f32.partialorder %v566, 8.507059e+37
        %v568 = vand.u32 %v553, 2147483648
        %v569 = vor.u32 1.1754944e-38, %v568
        %v570 = vsel %vm567, %v569, %v565
        %v571 = vrcp.pop %v556
        %v572 = vmul.f32 %v556, %v571
        %v573 = vsub.f32 1.0, %v572
        %v574 = vmul.f32 %v571, %v573
        %v575 = vadd.f32 %v571, %v574
        %vm576 = vweird.f32 %v556
        %vm577 = vweird.f32 %v571
        %vm578 = vmor %vm576, %vm577
        %v579 = vsel %vm578, %v571, %v575
        %v580 = vand.u32 2147483647, %v556
        %vm581 = vcmp.eq.f32.partialorder %v580, 8.507059e+37
        %v582 = vand.u32 %v556, 2147483648
        %v583 = vor.u32 1.1754944e-38, %v582
        %v584 = vsel %vm581, %v583, %v579
        %v585 = vmul.f32 %v548, %v570
        %v586 = vmul.f32 %v550, %v584
        %vm587 = vcmask 130048
        %v589 = vsel %vm587, %v422, 0
        %591 = vmatpush.bf16.msra.mxu0 0
        %592 = vmatpush.bf16.msra.mxu0 0
        %593 = vmatpush.bf16.msra.mxu0 0
        %594 = vmatpush.bf16.msra.mxu0 0
        %595 = vmatpush.bf16.msra.mxu0 0
        %596 = vmatpush.bf16.msra.mxu0 0
        %597 = vmatpush.bf16.msra.mxu0 0
        %598 = vmatpush.bf16.msra.mxu0 %v455
        %599 = vmatmul.bf16.gmra.mxu0 %v589
        %v600 = vpop.f32.mrf.mxu0
        %v601 = vadd.f32 0.0, %v600
        %v602 = vpop.f32.mrf.mxu0
        %v603 = vadd.f32 0.0, %v602
        %604 = vdwg.mxu0
        %v605 = vpack.c.bf16 %v603, %v601
        %v606 = vld [vmem:[#allocation2] sm:$0xff]
        %v607 = vld [vmem:[#allocation2 + $0x8] sm:$0xff]
        %v608 = vld [vmem:[#allocation2 + $0x10] sm:$0xff]
        %v609 = vld [vmem:[#allocation2 + $0x18] sm:$0xff]
        %v610 = vld [vmem:[#allocation2 + $0x20] sm:$0xff]
        %v611 = vld [vmem:[#allocation2 + $0x28] sm:$0xff]
        %v612 = vld [vmem:[#allocation2 + $0x30] sm:$0xff]
        %v613 = vld [vmem:[#allocation2 + $0x38] sm:$0xff]
        %v614 = vld [vmem:[#allocation2 + $0x40] sm:$0xff]
        %v615 = vld [vmem:[#allocation2 + $0x48] sm:$0xff]
        %v616 = vld [vmem:[#allocation2 + $0x50] sm:$0xff]
        %v617 = vld [vmem:[#allocation2 + $0x58] sm:$0xff]
        %v618 = vld [vmem:[#allocation2 + $0x60] sm:$0xff]
        %v619 = vld [vmem:[#allocation2 + $0x68] sm:$0xff]
        %v620 = vld [vmem:[#allocation2 + $0x70] sm:$0xff]
        %v621 = vld [vmem:[#allocation2 + $0x78] sm:$0xff]
        %v622 = vld [vmem:[#allocation2 + $0x80] sm:$0xff]
        %v623 = vld [vmem:[#allocation2 + $0x88] sm:$0xff]
        %v624 = vld [vmem:[#allocation2 + $0x90] sm:$0xff]
        %v625 = vld [vmem:[#allocation2 + $0x98] sm:$0xff]
        %v626 = vld [vmem:[#allocation2 + $0xa0] sm:$0xff]
        %v627 = vld [vmem:[#allocation2 + $0xa8] sm:$0xff]
        %v628 = vld [vmem:[#allocation2 + $0xb0] sm:$0xff]
        %v629 = vld [vmem:[#allocation2 + $0xb8] sm:$0xff]
        %v630 = vld [vmem:[#allocation2 + $0xc0] sm:$0xff]
        %v631 = vld [vmem:[#allocation2 + $0xc8] sm:$0xff]
        %v632 = vld [vmem:[#allocation2 + $0xd0] sm:$0xff]
        %v633 = vld [vmem:[#allocation2 + $0xd8] sm:$0xff]
        %v634 = vld [vmem:[#allocation2 + $0xe0] sm:$0xff]
        %v635 = vld [vmem:[#allocation2 + $0xe8] sm:$0xff]
        %v636 = vld [vmem:[#allocation2 + $0xf0] sm:$0xff]
        %v637 = vld [vmem:[#allocation2 + $0xf8] sm:$0xff]
        %v670 = vunpack.c.l.b16 %v606
        %v671 = vunpack.c.h.b16 %v606
        %v672 = vunpack.c.l.b16 %v607
        %v673 = vunpack.c.h.b16 %v607
        %v674 = vunpack.c.l.b16 %v608
        %v675 = vunpack.c.h.b16 %v608
        %v676 = vunpack.c.l.b16 %v609
        %v677 = vunpack.c.h.b16 %v609
        %v678 = vunpack.c.l.b16 %v610
        %v679 = vunpack.c.h.b16 %v610
        %v680 = vunpack.c.l.b16 %v611
        %v681 = vunpack.c.h.b16 %v611
        %v682 = vunpack.c.l.b16 %v612
        %v683 = vunpack.c.h.b16 %v612
        %v684 = vunpack.c.l.b16 %v613
        %v685 = vunpack.c.h.b16 %v613
        %v686 = vunpack.c.l.b16 %v614
        %v687 = vunpack.c.h.b16 %v614
        %v688 = vunpack.c.l.b16 %v615
        %v689 = vunpack.c.h.b16 %v615
        %v690 = vunpack.c.l.b16 %v616
        %v691 = vunpack.c.h.b16 %v616
        %v692 = vunpack.c.l.b16 %v617
        %v693 = vunpack.c.h.b16 %v617
        %v694 = vunpack.c.l.b16 %v618
        %v695 = vunpack.c.h.b16 %v618
        %v696 = vunpack.c.l.b16 %v619
        %v697 = vunpack.c.h.b16 %v619
        %v698 = vunpack.c.l.b16 %v620
        %v699 = vunpack.c.h.b16 %v620
        %v700 = vunpack.c.l.b16 %v621
        %v701 = vunpack.c.h.b16 %v621
        %v702 = vunpack.c.l.b16 %v622
        %v703 = vunpack.c.h.b16 %v622
        %v704 = vunpack.c.l.b16 %v623
        %v705 = vunpack.c.h.b16 %v623
        %v706 = vunpack.c.l.b16 %v624
        %v707 = vunpack.c.h.b16 %v624
        %v708 = vunpack.c.l.b16 %v625
        %v709 = vunpack.c.h.b16 %v625
        %v710 = vunpack.c.l.b16 %v626
        %v711 = vunpack.c.h.b16 %v626
        %v712 = vunpack.c.l.b16 %v627
        %v713 = vunpack.c.h.b16 %v627
        %v714 = vunpack.c.l.b16 %v628
        %v715 = vunpack.c.h.b16 %v628
        %v716 = vunpack.c.l.b16 %v629
        %v717 = vunpack.c.h.b16 %v629
        %v718 = vunpack.c.l.b16 %v630
        %v719 = vunpack.c.h.b16 %v630
        %v720 = vunpack.c.l.b16 %v631
        %v721 = vunpack.c.h.b16 %v631
        %v722 = vunpack.c.l.b16 %v632
        %v723 = vunpack.c.h.b16 %v632
        %v724 = vunpack.c.l.b16 %v633
        %v725 = vunpack.c.h.b16 %v633
        %v726 = vunpack.c.l.b16 %v634
        %v727 = vunpack.c.h.b16 %v634
        %v728 = vunpack.c.l.b16 %v635
        %v729 = vunpack.c.h.b16 %v635
        %v730 = vunpack.c.l.b16 %v636
        %v731 = vunpack.c.h.b16 %v636
        %v732 = vunpack.c.l.b16 %v637
        %v733 = vunpack.c.h.b16 %v637
        %v734 = vpack.c.b16 %v674, %v670
        %v735 = vpack.c.b16 %v675, %v671
        %v736 = vpack.c.b16 %v676, %v672
        %v737 = vpack.c.b16 %v677, %v673
        %v738 = vpack.c.b16 %v682, %v678
        %v739 = vpack.c.b16 %v683, %v679
        %v740 = vpack.c.b16 %v684, %v680
        %v741 = vpack.c.b16 %v685, %v681
        %v742 = vpack.c.b16 %v690, %v686
        %v743 = vpack.c.b16 %v691, %v687
        %v744 = vpack.c.b16 %v692, %v688
        %v745 = vpack.c.b16 %v693, %v689
        %v746 = vpack.c.b16 %v698, %v694
        %v747 = vpack.c.b16 %v699, %v695
        %v748 = vpack.c.b16 %v700, %v696
        %v749 = vpack.c.b16 %v701, %v697
        %v750 = vpack.c.b16 %v706, %v702
        %v751 = vpack.c.b16 %v707, %v703
        %v752 = vpack.c.b16 %v708, %v704
        %v753 = vpack.c.b16 %v709, %v705
        %v754 = vpack.c.b16 %v714, %v710
        %v755 = vpack.c.b16 %v715, %v711
        %v756 = vpack.c.b16 %v716, %v712
        %v757 = vpack.c.b16 %v717, %v713
        %v758 = vpack.c.b16 %v722, %v718
        %v759 = vpack.c.b16 %v723, %v719
        %v760 = vpack.c.b16 %v724, %v720
        %v761 = vpack.c.b16 %v725, %v721
        %v762 = vpack.c.b16 %v730, %v726
        %v763 = vpack.c.b16 %v731, %v727
        %v764 = vpack.c.b16 %v732, %v728
        %v765 = vpack.c.b16 %v733, %v729
        %798 = vmatpush.bf16.msra.mxu0 %v762
        %799 = vmatpush.bf16.msra.mxu0 %v758
        %800 = vmatpush.bf16.msra.mxu0 %v754
        %801 = vmatpush.bf16.msra.mxu0 %v750
        %802 = vmatpush.bf16.msra.mxu0 %v746
        %803 = vmatpush.bf16.msra.mxu0 %v742
        %804 = vmatpush.bf16.msra.mxu0 %v738
        %805 = vmatpush.bf16.msra.mxu0 %v734
        %806 = vmatmul.bf16.gmra.mxu0 %v605
        %v807 = vpop.f32.mrf.mxu0
        %v808 = vadd.f32 0.0, %v807
        %v809 = vpop.f32.mrf.mxu0
        %v810 = vadd.f32 0.0, %v809
        %811 = vdwg.mxu0
        %812 = vmatpush.bf16.msra.mxu0 %v763
        %813 = vmatpush.bf16.msra.mxu0 %v759
        %814 = vmatpush.bf16.msra.mxu0 %v755
        %815 = vmatpush.bf16.msra.mxu0 %v751
        %816 = vmatpush.bf16.msra.mxu0 %v747
        %817 = vmatpush.bf16.msra.mxu0 %v743
        %818 = vmatpush.bf16.msra.mxu0 %v739
        %819 = vmatpush.bf16.msra.mxu0 %v735
        %820 = vmatmul.bf16.gmra.mxu0 %v605
        %v821 = vpop.f32.mrf.mxu0
        %v822 = vadd.f32 0.0, %v821
        %v823 = vpop.f32.mrf.mxu0
        %v824 = vadd.f32 0.0, %v823
        %825 = vdwg.mxu0
        %826 = vmatpush.bf16.msra.mxu0 %v764
        %827 = vmatpush.bf16.msra.mxu0 %v760
        %828 = vmatpush.bf16.msra.mxu0 %v756
        %829 = vmatpush.bf16.msra.mxu0 %v752
        %830 = vmatpush.bf16.msra.mxu0 %v748
        %831 = vmatpush.bf16.msra.mxu0 %v744
        %832 = vmatpush.bf16.msra.mxu0 %v740
        %833 = vmatpush.bf16.msra.mxu0 %v736
        %834 = vmatmul.bf16.gmra.mxu0 %v605
        %v835 = vpop.f32.mrf.mxu0
        %v836 = vadd.f32 0.0, %v835
        %v837 = vpop.f32.mrf.mxu0
        %v838 = vadd.f32 0.0, %v837
        %839 = vdwg.mxu0
        %840 = vmatpush.bf16.msra.mxu0 %v765
        %841 = vmatpush.bf16.msra.mxu0 %v761
        %842 = vmatpush.bf16.msra.mxu0 %v757
        %843 = vmatpush.bf16.msra.mxu0 %v753
        %844 = vmatpush.bf16.msra.mxu0 %v749
        %845 = vmatpush.bf16.msra.mxu0 %v745
        %846 = vmatpush.bf16.msra.mxu0 %v741
        %847 = vmatpush.bf16.msra.mxu0 %v737
        %848 = vmatmul.bf16.gmra.mxu0 %v605
        %v849 = vpop.f32.mrf.mxu0
        %v850 = vadd.f32 0.0, %v849
        %v851 = vpop.f32.mrf.mxu0
        %v852 = vadd.f32 0.0, %v851
        %853 = vdwg.mxu0
        %855 = vset.pattern.permute.xlu0 0
        %856 = vperm.xlu0 %855, %v585
        %v857 = vpop.permute.xlu0 %856
        %860 = vset.pattern.permute.xlu0 0
        %861 = vperm.xlu0 %860, %v586
        %v862 = vpop.permute.xlu0 %861
        %v864 = vmul.f32 %v857, %v808
        %v865 = vmul.f32 %v862, %v810
        %866 = vset.pattern.permute.xlu0 1
        %867 = vperm.xlu0 %866, %v585
        %v868 = vpop.permute.xlu0 %867
        %870 = vset.pattern.permute.xlu0 1
        %871 = vperm.xlu0 %870, %v586
        %v872 = vpop.permute.xlu0 %871
        %v874 = vmul.f32 %v868, %v822
        %v875 = vmul.f32 %v872, %v824
        %v876 = vadd.f32 %v864, %v874
        %v877 = vadd.f32 %v865, %v875
        %878 = vset.pattern.permute.xlu0 2
        %879 = vperm.xlu0 %878, %v585
        %v880 = vpop.permute.xlu0 %879
        %882 = vset.pattern.permute.xlu0 2
        %883 = vperm.xlu0 %882, %v586
        %v884 = vpop.permute.xlu0 %883
        %v886 = vmul.f32 %v880, %v836
        %v887 = vmul.f32 %v884, %v838
        %v888 = vadd.f32 %v876, %v886
        %v889 = vadd.f32 %v877, %v887
        %890 = vset.pattern.permute.xlu0 3
        %891 = vperm.xlu0 %890, %v585
        %v892 = vpop.permute.xlu0 %891
        %894 = vset.pattern.permute.xlu0 3
        %895 = vperm.xlu0 %894, %v586
        %v896 = vpop.permute.xlu0 %895
        %v898 = vmul.f32 %v892, %v850
        %v899 = vmul.f32 %v896, %v852
        %v900 = vadd.f32 %v888, %v898
        %v901 = vadd.f32 %v889, %v899
        %v902 = vadd.f32 %v900, %v453
        %v903 = vadd.f32 %v901, %v454
        %v904 = vmax.f32 %v902, 0.0
        %v905 = vmax.f32 %v903, 0.0
        %v906 = vpack.c.bf16 %v905, %v904
        %s907 = scalar_lea.vmem %s4, 64
        %v908 = vld [vmem:[%s907] sm:$0xf]
        %v909 = vld [vmem:[%s907 + $0x4] sm:$0xf]
        %v910 = vld [vmem:[%s907 + $0x8] sm:$0xf]
        %v911 = vld [vmem:[%s907 + $0xc] sm:$0xf]
        %v912 = vld [vmem:[%s907 + $0x10] sm:$0xf]
        %v913 = vld [vmem:[%s907 + $0x14] sm:$0xf]
        %v914 = vld [vmem:[%s907 + $0x18] sm:$0xf]
        %v915 = vld [vmem:[%s907 + $0x1c] sm:$0xf]
        %v916 = vld [vmem:[%s907 + $0x20] sm:$0xf]
        %v917 = vld [vmem:[%s907 + $0x24] sm:$0xf]
        %v918 = vld [vmem:[%s907 + $0x28] sm:$0xf]
        %v919 = vld [vmem:[%s907 + $0x2c] sm:$0xf]
        %v920 = vld [vmem:[%s907 + $0x30] sm:$0xf]
        %v921 = vld [vmem:[%s907 + $0x34] sm:$0xf]
        %v922 = vld [vmem:[%s907 + $0x38] sm:$0xf]
        %v923 = vld [vmem:[%s907 + $0x3c] sm:$0xf]
        %s924 = scalar_lea.vmem %s5, 1
        %v925 = vld [vmem:[%s924] sm:$0x1]
        %v927 = vperm.slane %v925, 0
        %v945 = vunpack.c.l.b16 %v908
        %v946 = vunpack.c.l.b16 %v909
        %v947 = vunpack.c.l.b16 %v910
        %v948 = vunpack.c.l.b16 %v911
        %v949 = vunpack.c.l.b16 %v912
        %v950 = vunpack.c.l.b16 %v913
        %v951 = vunpack.c.l.b16 %v914
        %v952 = vunpack.c.l.b16 %v915
        %v953 = vunpack.c.l.b16 %v916
        %v954 = vunpack.c.l.b16 %v917
        %v955 = vunpack.c.l.b16 %v918
        %v956 = vunpack.c.l.b16 %v919
        %v957 = vunpack.c.l.b16 %v920
        %v958 = vunpack.c.l.b16 %v921
        %v959 = vunpack.c.l.b16 %v922
        %v960 = vunpack.c.l.b16 %v923
        %v961 = vpack.c.b16 %v946, %v945
        %v962 = vpack.c.b16 %v948, %v947
        %v963 = vpack.c.b16 %v950, %v949
        %v964 = vpack.c.b16 %v952, %v951
        %v965 = vpack.c.b16 %v954, %v953
        %v966 = vpack.c.b16 %v956, %v955
        %v967 = vpack.c.b16 %v958, %v957
        %v968 = vpack.c.b16 %v960, %v959
        %977 = vmatpush.bf16.msra.mxu0 %v968
        %978 = vmatpush.bf16.msra.mxu0 %v967
        %979 = vmatpush.bf16.msra.mxu0 %v966
        %980 = vmatpush.bf16.msra.mxu0 %v965
        %981 = vmatpush.bf16.msra.mxu0 %v964
        %982 = vmatpush.bf16.msra.mxu0 %v963
        %983 = vmatpush.bf16.msra.mxu0 %v962
        %984 = vmatpush.bf16.msra.mxu0 %v961
        %985 = vmatmul.bf16.gmra.mxu0 %v906
        %v986 = vpop.f32.mrf.mxu0
        %v987 = vadd.f32 %v927, %v986
        %v988 = vpop.f32.mrf.mxu0
        %v989 = vadd.f32 %v927, %v988
        %990 = vdwg.mxu0
        %v991 = vsel %vm538, %v987, -inf
        %992 = vmax.xlane.f32.xlu0 %v991
        %v993 = vpop.xlane.xlu0 %992
        %v994 = vsel %vm538, %v989, -inf
        %995 = vmax.xlane.f32.xlu0 %v994
        %v996 = vpop.xlane.xlu0 %995
        %v997 = vsub.f32 %v987, %v993
        %v998 = vsub.f32 %v989, %v996
        %v999 = vmul.f32 %v997, 1.442695
        %v1000 = vpow.pop %v999
        %v1001 = vmul.f32 %v998, 1.442695
        %v1002 = vpow.pop %v1001
        %v1003 = vsel %vm538, %v1000, 0.0
        %1004 = vadd.xlane.f32.xlu0 %v1003
        %v1005 = vpop.xlane.xlu0 %1004
        %v1006 = vsel %vm538, %v1002, 0.0
        %1007 = vadd.xlane.f32.xlu0 %v1006
        %v1008 = vpop.xlane.xlu0 %1007
        %v1009 = vrcp.pop %v1005
        %v1010 = vmul.f32 %v1005, %v1009
        %v1011 = vsub.f32 1.0, %v1010
        %v1012 = vmul.f32 %v1009, %v1011
        %v1013 = vadd.f32 %v1009, %v1012
        %vm1014 = vweird.f32 %v1005
        %vm1015 = vweird.f32 %v1009
        %vm1016 = vmor %vm1014, %vm1015
        %v1017 = vsel %vm1016, %v1009, %v1013
        %v1018 = vand.u32 2147483647, %v1005
        %vm1019 = vcmp.eq.f32.partialorder %v1018, 8.507059e+37
        %v1020 = vand.u32 %v1005, 2147483648
        %v1021 = vor.u32 1.1754944e-38, %v1020
        %v1022 = vsel %vm1019, %v1021, %v1017
        %v1023 = vrcp.pop %v1008
        %v1024 = vmul.f32 %v1008, %v1023
        %v1025 = vsub.f32 1.0, %v1024
        %v1026 = vmul.f32 %v1023, %v1025
        %v1027 = vadd.f32 %v1023, %v1026
        %vm1028 = vweird.f32 %v1008
        %vm1029 = vweird.f32 %v1023
        %vm1030 = vmor %vm1028, %vm1029
        %v1031 = vsel %vm1030, %v1023, %v1027
        %v1032 = vand.u32 2147483647, %v1008
        %vm1033 = vcmp.eq.f32.partialorder %v1032, 8.507059e+37
        %v1034 = vand.u32 %v1008, 2147483648
        %v1035 = vor.u32 1.1754944e-38, %v1034
        %v1036 = vsel %vm1033, %v1035, %v1031
        %v1037 = vmul.f32 %v1000, %v1022
        %v1038 = vmul.f32 %v1002, %v1036
        %1039 = vmatpush.bf16.msra.mxu0 0
        %1040 = vmatpush.bf16.msra.mxu0 0
        %1041 = vmatpush.bf16.msra.mxu0 0
        %1042 = vmatpush.bf16.msra.mxu0 0
        %1043 = vmatpush.bf16.msra.mxu0 0
        %1044 = vmatpush.bf16.msra.mxu0 0
        %1045 = vmatpush.bf16.msra.mxu0 0
        %1046 = vmatpush.bf16.msra.mxu0 %v906
        %1047 = vmatmul.bf16.gmra.mxu0 %v589
        %v1048 = vpop.f32.mrf.mxu0
        %v1049 = vadd.f32 0.0, %v1048
        %v1050 = vpop.f32.mrf.mxu0
        %v1051 = vadd.f32 0.0, %v1050
        %1052 = vdwg.mxu0
        %v1053 = vpack.c.bf16 %v1051, %v1049
        %s1054 = scalar_lea.vmem [#allocation2], 256
        %v1055 = vld [vmem:[%s1054] sm:$0xff]
        %v1056 = vld [vmem:[%s1054 + $0x8] sm:$0xff]
        %v1057 = vld [vmem:[%s1054 + $0x10] sm:$0xff]
        %v1058 = vld [vmem:[%s1054 + $0x18] sm:$0xff]
        %v1059 = vld [vmem:[%s1054 + $0x20] sm:$0xff]
        %v1060 = vld [vmem:[%s1054 + $0x28] sm:$0xff]
        %v1061 = vld [vmem:[%s1054 + $0x30] sm:$0xff]
        %v1062 = vld [vmem:[%s1054 + $0x38] sm:$0xff]
        %v1063 = vld [vmem:[%s1054 + $0x40] sm:$0xff]
        %v1064 = vld [vmem:[%s1054 + $0x48] sm:$0xff]
        %v1065 = vld [vmem:[%s1054 + $0x50] sm:$0xff]
        %v1066 = vld [vmem:[%s1054 + $0x58] sm:$0xff]
        %v1067 = vld [vmem:[%s1054 + $0x60] sm:$0xff]
        %v1068 = vld [vmem:[%s1054 + $0x68] sm:$0xff]
        %v1069 = vld [vmem:[%s1054 + $0x70] sm:$0xff]
        %v1070 = vld [vmem:[%s1054 + $0x78] sm:$0xff]
        %v1071 = vld [vmem:[%s1054 + $0x80] sm:$0xff]
        %v1072 = vld [vmem:[%s1054 + $0x88] sm:$0xff]
        %v1073 = vld [vmem:[%s1054 + $0x90] sm:$0xff]
        %v1074 = vld [vmem:[%s1054 + $0x98] sm:$0xff]
        %v1075 = vld [vmem:[%s1054 + $0xa0] sm:$0xff]
        %v1076 = vld [vmem:[%s1054 + $0xa8] sm:$0xff]
        %v1077 = vld [vmem:[%s1054 + $0xb0] sm:$0xff]
        %v1078 = vld [vmem:[%s1054 + $0xb8] sm:$0xff]
        %v1079 = vld [vmem:[%s1054 + $0xc0] sm:$0xff]
        %v1080 = vld [vmem:[%s1054 + $0xc8] sm:$0xff]
        %v1081 = vld [vmem:[%s1054 + $0xd0] sm:$0xff]
        %v1082 = vld [vmem:[%s1054 + $0xd8] sm:$0xff]
        %v1083 = vld [vmem:[%s1054 + $0xe0] sm:$0xff]
        %v1084 = vld [vmem:[%s1054 + $0xe8] sm:$0xff]
        %v1085 = vld [vmem:[%s1054 + $0xf0] sm:$0xff]
        %v1086 = vld [vmem:[%s1054 + $0xf8] sm:$0xff]
        %v1119 = vunpack.c.l.b16 %v1055
        %v1120 = vunpack.c.h.b16 %v1055
        %v1121 = vunpack.c.l.b16 %v1056
        %v1122 = vunpack.c.h.b16 %v1056
        %v1123 = vunpack.c.l.b16 %v1057
        %v1124 = vunpack.c.h.b16 %v1057
        %v1125 = vunpack.c.l.b16 %v1058
        %v1126 = vunpack.c.h.b16 %v1058
        %v1127 = vunpack.c.l.b16 %v1059
        %v1128 = vunpack.c.h.b16 %v1059
        %v1129 = vunpack.c.l.b16 %v1060
        %v1130 = vunpack.c.h.b16 %v1060
        %v1131 = vunpack.c.l.b16 %v1061
        %v1132 = vunpack.c.h.b16 %v1061
        %v1133 = vunpack.c.l.b16 %v1062
        %v1134 = vunpack.c.h.b16 %v1062
        %v1135 = vunpack.c.l.b16 %v1063
        %v1136 = vunpack.c.h.b16 %v1063
        %v1137 = vunpack.c.l.b16 %v1064
        %v1138 = vunpack.c.h.b16 %v1064
        %v1139 = vunpack.c.l.b16 %v1065
        %v1140 = vunpack.c.h.b16 %v1065
        %v1141 = vunpack.c.l.b16 %v1066
        %v1142 = vunpack.c.h.b16 %v1066
        %v1143 = vunpack.c.l.b16 %v1067
        %v1144 = vunpack.c.h.b16 %v1067
        %v1145 = vunpack.c.l.b16 %v1068
        %v1146 = vunpack.c.h.b16 %v1068
        %v1147 = vunpack.c.l.b16 %v1069
        %v1148 = vunpack.c.h.b16 %v1069
        %v1149 = vunpack.c.l.b16 %v1070
        %v1150 = vunpack.c.h.b16 %v1070
        %v1151 = vunpack.c.l.b16 %v1071
        %v1152 = vunpack.c.h.b16 %v1071
        %v1153 = vunpack.c.l.b16 %v1072
        %v1154 = vunpack.c.h.b16 %v1072
        %v1155 = vunpack.c.l.b16 %v1073
        %v1156 = vunpack.c.h.b16 %v1073
        %v1157 = vunpack.c.l.b16 %v1074
        %v1158 = vunpack.c.h.b16 %v1074
        %v1159 = vunpack.c.l.b16 %v1075
        %v1160 = vunpack.c.h.b16 %v1075
        %v1161 = vunpack.c.l.b16 %v1076
        %v1162 = vunpack.c.h.b16 %v1076
        %v1163 = vunpack.c.l.b16 %v1077
        %v1164 = vunpack.c.h.b16 %v1077
        %v1165 = vunpack.c.l.b16 %v1078
        %v1166 = vunpack.c.h.b16 %v1078
        %v1167 = vunpack.c.l.b16 %v1079
        %v1168 = vunpack.c.h.b16 %v1079
        %v1169 = vunpack.c.l.b16 %v1080
        %v1170 = vunpack.c.h.b16 %v1080
        %v1171 = vunpack.c.l.b16 %v1081
        %v1172 = vunpack.c.h.b16 %v1081
        %v1173 = vunpack.c.l.b16 %v1082
        %v1174 = vunpack.c.h.b16 %v1082
        %v1175 = vunpack.c.l.b16 %v1083
        %v1176 = vunpack.c.h.b16 %v1083
        %v1177 = vunpack.c.l.b16 %v1084
        %v1178 = vunpack.c.h.b16 %v1084
        %v1179 = vunpack.c.l.b16 %v1085
        %v1180 = vunpack.c.h.b16 %v1085
        %v1181 = vunpack.c.l.b16 %v1086
        %v1182 = vunpack.c.h.b16 %v1086
        %v1183 = vpack.c.b16 %v1123, %v1119
        %v1184 = vpack.c.b16 %v1124, %v1120
        %v1185 = vpack.c.b16 %v1125, %v1121
        %v1186 = vpack.c.b16 %v1126, %v1122
        %v1187 = vpack.c.b16 %v1131, %v1127
        %v1188 = vpack.c.b16 %v1132, %v1128
        %v1189 = vpack.c.b16 %v1133, %v1129
        %v1190 = vpack.c.b16 %v1134, %v1130
        %v1191 = vpack.c.b16 %v1139, %v1135
        %v1192 = vpack.c.b16 %v1140, %v1136
        %v1193 = vpack.c.b16 %v1141, %v1137
        %v1194 = vpack.c.b16 %v1142, %v1138
        %v1195 = vpack.c.b16 %v1147, %v1143
        %v1196 = vpack.c.b16 %v1148, %v1144
        %v1197 = vpack.c.b16 %v1149, %v1145
        %v1198 = vpack.c.b16 %v1150, %v1146
        %v1199 = vpack.c.b16 %v1155, %v1151
        %v1200 = vpack.c.b16 %v1156, %v1152
        %v1201 = vpack.c.b16 %v1157, %v1153
        %v1202 = vpack.c.b16 %v1158, %v1154
        %v1203 = vpack.c.b16 %v1163, %v1159
        %v1204 = vpack.c.b16 %v1164, %v1160
        %v1205 = vpack.c.b16 %v1165, %v1161
        %v1206 = vpack.c.b16 %v1166, %v1162
        %v1207 = vpack.c.b16 %v1171, %v1167
        %v1208 = vpack.c.b16 %v1172, %v1168
        %v1209 = vpack.c.b16 %v1173, %v1169
        %v1210 = vpack.c.b16 %v1174, %v1170
        %v1211 = vpack.c.b16 %v1179, %v1175
        %v1212 = vpack.c.b16 %v1180, %v1176
        %v1213 = vpack.c.b16 %v1181, %v1177
        %v1214 = vpack.c.b16 %v1182, %v1178
        %1247 = vmatpush.bf16.msra.mxu0 %v1211
        %1248 = vmatpush.bf16.msra.mxu0 %v1207
        %1249 = vmatpush.bf16.msra.mxu0 %v1203
        %1250 = vmatpush.bf16.msra.mxu0 %v1199
        %1251 = vmatpush.bf16.msra.mxu0 %v1195
        %1252 = vmatpush.bf16.msra.mxu0 %v1191
        %1253 = vmatpush.bf16.msra.mxu0 %v1187
        %1254 = vmatpush.bf16.msra.mxu0 %v1183
        %1255 = vmatmul.bf16.gmra.mxu0 %v1053
        %v1256 = vpop.f32.mrf.mxu0
        %v1257 = vadd.f32 0.0, %v1256
        %v1258 = vpop.f32.mrf.mxu0
        %v1259 = vadd.f32 0.0, %v1258
        %1260 = vdwg.mxu0
        %1261 = vmatpush.bf16.msra.mxu0 %v1212
        %1262 = vmatpush.bf16.msra.mxu0 %v1208
        %1263 = vmatpush.bf16.msra.mxu0 %v1204
        %1264 = vmatpush.bf16.msra.mxu0 %v1200
        %1265 = vmatpush.bf16.msra.mxu0 %v1196
        %1266 = vmatpush.bf16.msra.mxu0 %v1192
        %1267 = vmatpush.bf16.msra.mxu0 %v1188
        %1268 = vmatpush.bf16.msra.mxu0 %v1184
        %1269 = vmatmul.bf16.gmra.mxu0 %v1053
        %v1270 = vpop.f32.mrf.mxu0
        %v1271 = vadd.f32 0.0, %v1270
        %v1272 = vpop.f32.mrf.mxu0
        %v1273 = vadd.f32 0.0, %v1272
        %1274 = vdwg.mxu0
        %1275 = vmatpush.bf16.msra.mxu0 %v1213
        %1276 = vmatpush.bf16.msra.mxu0 %v1209
        %1277 = vmatpush.bf16.msra.mxu0 %v1205
        %1278 = vmatpush.bf16.msra.mxu0 %v1201
        %1279 = vmatpush.bf16.msra.mxu0 %v1197
        %1280 = vmatpush.bf16.msra.mxu0 %v1193
        %1281 = vmatpush.bf16.msra.mxu0 %v1189
        %1282 = vmatpush.bf16.msra.mxu0 %v1185
        %1283 = vmatmul.bf16.gmra.mxu0 %v1053
        %v1284 = vpop.f32.mrf.mxu0
        %v1285 = vadd.f32 0.0, %v1284
        %v1286 = vpop.f32.mrf.mxu0
        %v1287 = vadd.f32 0.0, %v1286
        %1288 = vdwg.mxu0
        %1289 = vmatpush.bf16.msra.mxu0 %v1214
        %1290 = vmatpush.bf16.msra.mxu0 %v1210
        %1291 = vmatpush.bf16.msra.mxu0 %v1206
        %1292 = vmatpush.bf16.msra.mxu0 %v1202
        %1293 = vmatpush.bf16.msra.mxu0 %v1198
        %1294 = vmatpush.bf16.msra.mxu0 %v1194
        %1295 = vmatpush.bf16.msra.mxu0 %v1190
        %1296 = vmatpush.bf16.msra.mxu0 %v1186
        %1297 = vmatmul.bf16.gmra.mxu0 %v1053
        %v1298 = vpop.f32.mrf.mxu0
        %v1299 = vadd.f32 0.0, %v1298
        %v1300 = vpop.f32.mrf.mxu0
        %v1301 = vadd.f32 0.0, %v1300
        %1302 = vdwg.mxu0
        %1304 = vset.pattern.permute.xlu0 0
        %1305 = vperm.xlu0 %1304, %v1037
        %v1306 = vpop.permute.xlu0 %1305
        %1309 = vset.pattern.permute.xlu0 0
        %1310 = vperm.xlu0 %1309, %v1038
        %v1311 = vpop.permute.xlu0 %1310
        %v1313 = vmul.f32 %v1306, %v1257
        %v1314 = vmul.f32 %v1311, %v1259
        %1315 = vset.pattern.permute.xlu0 1
        %1316 = vperm.xlu0 %1315, %v1037
        %v1317 = vpop.permute.xlu0 %1316
        %1319 = vset.pattern.permute.xlu0 1
        %1320 = vperm.xlu0 %1319, %v1038
        %v1321 = vpop.permute.xlu0 %1320
        %v1323 = vmul.f32 %v1317, %v1271
        %v1324 = vmul.f32 %v1321, %v1273
        %v1325 = vadd.f32 %v1313, %v1323
        %v1326 = vadd.f32 %v1314, %v1324
        %1327 = vset.pattern.permute.xlu0 2
        %1328 = vperm.xlu0 %1327, %v1037
        %v1329 = vpop.permute.xlu0 %1328
        %1331 = vset.pattern.permute.xlu0 2
        %1332 = vperm.xlu0 %1331, %v1038
        %v1333 = vpop.permute.xlu0 %1332
        %v1335 = vmul.f32 %v1329, %v1285
        %v1336 = vmul.f32 %v1333, %v1287
        %v1337 = vadd.f32 %v1325, %v1335
        %v1338 = vadd.f32 %v1326, %v1336
        %1339 = vset.pattern.permute.xlu0 3
        %1340 = vperm.xlu0 %1339, %v1037
        %v1341 = vpop.permute.xlu0 %1340
        %1343 = vset.pattern.permute.xlu0 3
        %1344 = vperm.xlu0 %1343, %v1038
        %v1345 = vpop.permute.xlu0 %1344
        %v1347 = vmul.f32 %v1341, %v1299
        %v1348 = vmul.f32 %v1345, %v1301
        %v1349 = vadd.f32 %v1337, %v1347
        %v1350 = vadd.f32 %v1338, %v1348
        %v1351 = vadd.f32 %v1349, %v904
        %v1352 = vadd.f32 %v1350, %v905
        %v1353 = vmax.f32 %v1351, 0.0
        %v1354 = vmax.f32 %v1352, 0.0
        %v1355 = vpack.c.bf16 %v1354, %v1353
        %v1356 = vld [vmem:[%s7] sm:$0xf]
        %v1357 = vld [vmem:[%s7 + $0x4] sm:$0xf]
        %v1358 = vld [vmem:[%s7 + $0x8] sm:$0xf]
        %v1359 = vld [vmem:[%s7 + $0xc] sm:$0xf]
        %v1360 = vld [vmem:[%s7 + $0x10] sm:$0xf]
        %v1361 = vld [vmem:[%s7 + $0x14] sm:$0xf]
        %v1362 = vld [vmem:[%s7 + $0x18] sm:$0xf]
        %v1363 = vld [vmem:[%s7 + $0x1c] sm:$0xf]
        %v1364 = vld [vmem:[%s7 + $0x20] sm:$0xf]
        %v1365 = vld [vmem:[%s7 + $0x24] sm:$0xf]
        %v1366 = vld [vmem:[%s7 + $0x28] sm:$0xf]
        %v1367 = vld [vmem:[%s7 + $0x2c] sm:$0xf]
        %v1368 = vld [vmem:[%s7 + $0x30] sm:$0xf]
        %v1369 = vld [vmem:[%s7 + $0x34] sm:$0xf]
        %v1370 = vld [vmem:[%s7 + $0x38] sm:$0xf]
        %v1371 = vld [vmem:[%s7 + $0x3c] sm:$0xf]
        %v1372 = vld [vmem:[%s8] sm:$0x1]
        %v1374 = vperm.slane %v1372, 0
        %v1392 = vunpack.c.l.b16 %v1356
        %v1393 = vunpack.c.l.b16 %v1357
        %v1394 = vunpack.c.l.b16 %v1358
        %v1395 = vunpack.c.l.b16 %v1359
        %v1396 = vunpack.c.l.b16 %v1360
        %v1397 = vunpack.c.l.b16 %v1361
        %v1398 = vunpack.c.l.b16 %v1362
        %v1399 = vunpack.c.l.b16 %v1363
        %v1400 = vunpack.c.l.b16 %v1364
        %v1401 = vunpack.c.l.b16 %v1365
        %v1402 = vunpack.c.l.b16 %v1366
        %v1403 = vunpack.c.l.b16 %v1367
        %v1404 = vunpack.c.l.b16 %v1368
        %v1405 = vunpack.c.l.b16 %v1369
        %v1406 = vunpack.c.l.b16 %v1370
        %v1407 = vunpack.c.l.b16 %v1371
        %v1408 = vpack.c.b16 %v1393, %v1392
        %v1409 = vpack.c.b16 %v1395, %v1394
        %v1410 = vpack.c.b16 %v1397, %v1396
        %v1411 = vpack.c.b16 %v1399, %v1398
        %v1412 = vpack.c.b16 %v1401, %v1400
        %v1413 = vpack.c.b16 %v1403, %v1402
        %v1414 = vpack.c.b16 %v1405, %v1404
        %v1415 = vpack.c.b16 %v1407, %v1406
        %1424 = vmatpush.bf16.msra.mxu0 %v1415
        %1425 = vmatpush.bf16.msra.mxu0 %v1414
        %1426 = vmatpush.bf16.msra.mxu0 %v1413
        %1427 = vmatpush.bf16.msra.mxu0 %v1412
        %1428 = vmatpush.bf16.msra.mxu0 %v1411
        %1429 = vmatpush.bf16.msra.mxu0 %v1410
        %1430 = vmatpush.bf16.msra.mxu0 %v1409
        %1431 = vmatpush.bf16.msra.mxu0 %v1408
        %1432 = vmatmul.bf16.gmra.mxu0 %v1355
        %v1433 = vpop.f32.mrf.mxu0
        %v1434 = vadd.f32 %v1374, %v1433
        %v1435 = vpop.f32.mrf.mxu0
        %v1436 = vadd.f32 %v1374, %v1435
        %1437 = vdwg.mxu0
        %1438 = vst [vmem:[%s366] sm:$0xff] %v1434
        %1439 = vst [vmem:[%s366 + $0x8] sm:$0xff] %v1436
        %p1440 = scmp.lt.s32.totalorder %s21, 1
        %s1441 = scalar_select %p1440, %s21, 1
        %s1442 = smul.addr %s1441, 2
        %s1443 = smul.addr %s1442, 8
        %s1444 = scalar_lea.vmem %s9, %s1443
        // Predicated region
        $region61: #{pdggnn_forward.1} parent=55 // pred_check
          %p1445 = pneg %p238
        $region62: #{pdggnn_forward.1} parent=55 // pred_check_branch
          %1447 = sbr.rel (%p1445) target = $region64
        $region63: #{pdggnn_forward.1} parent=55 // pred_region
          _
        $region64: #{pdggnn_forward.1} parent=55 // pred_fallthru
          _
      $region56: #{pdggnn_forward.1} parent=5 // pred_fallthru
        _
      %p1448 = scmp.le.s32.totalorder 2, %s16
      // Predicated region
      $region65: #{pdggnn_forward.1} parent=5 // pred_check
        %p1449 = pneg %p1448
      $region66: #{pdggnn_forward.1} parent=5 // pred_check_branch
        %1451 = sbr.rel (%p1449) target = $region68
      $region67: #{pdggnn_forward.1} parent=5 // pred_region
        %s1452 = ssub.s32 %s16, 2
        // Predicated region
        $region69: #{pdggnn_forward.1} parent=67 // pred_check
          %p1453 = pneg %p244
        $region70: #{pdggnn_forward.1} parent=67 // pred_check_branch
          %1455 = sbr.rel (%p1453) target = $region72
        $region71: #{pdggnn_forward.1} parent=67 // pred_region
          %p1456 = scmp.lt.s32.totalorder %s22, 1
          %s1457 = scalar_select %p1456, %s22, 1
          %s1458 = smul.addr %s1457, 2
          %s1459 = smul.addr %s1458, 8
          %s1460 = scalar_lea.vmem %s9, %s1459
        $region72: #{pdggnn_forward.1} parent=67 // pred_fallthru
          _
      $region68: #{pdggnn_forward.1} parent=5 // pred_fallthru
        _
    $region6: #{pdggnn_forward.1} parent=1 // loop_footer
      %s20 = sadd.s32 1, %s16
    $region7: #{pdggnn_forward.1} parent=1 // loop_footer_branch
      %15 = sbr.rel target = $region3
    $region8: #{pdggnn_forward.1} parent=1 // loop_exit
      _
    %1461 = vsyncpa [#allocation3], 1
    %s1462 = scalar_lea.sflag [#allocation3], 1
    %1463 = vsyncpa %s1462, 1

</llo_original>
